<compile_context>
chip_gen: v7x
topology: tpu7x:2x2x1
jax: 0.10.0
libtpu: 0.0.40
codegen_flags: <defaults>
</compile_context>

<pallas_src>
import functools
import math

import jax
import jax.numpy as jnp
import numpy as np
from jax import lax
from jax.experimental import pallas as pl
from jax.experimental.pallas import tpu as pltpu


HALO_BLK = 128  # one 128-lane neighbour block fetched on each side of the body tile


def _discriminator_kernel(dilations, kernel_size, tile_t, halo, seq_len,
                          layers_meta, bias_col,
                          xl_ref, xb_ref, xr_ref, p_ref, out_ref, win_ref):
    """One grid step = (batch b, time tile t).

    xl_ref : (1, 1, 128)        left-neighbour block (index clamped at t == 0)
    xb_ref : (1, 1, tile_t)     body tile
    xr_ref : (1, 1, 128)        right-neighbour block (clamped at t == n_t - 1)
    p_ref  : (R, bias_col + 1)  packed folded conv weights (tap-major) + biases
    out_ref: (1, 1, tile_t)
    win_ref: (1, 128 + tile_t + 128) f32 scratch: assembled input window
    """
    n_layers = len(dilations)
    K = kernel_size
    t = pl.program_id(1)
    n_t = pl.num_programs(1)

    # ---- assemble the input window [left 128 | body | right 128] -----------
    # All three stores are lane-aligned full-block stores (no masking/shifting).
    win_ref[:, 0:HALO_BLK] = xl_ref[0].astype(jnp.float32)
    win_ref[:, HALO_BLK:HALO_BLK + tile_t] = xb_ref[0].astype(jnp.float32)
    win_ref[:, HALO_BLK + tile_t:] = xr_ref[0].astype(jnp.float32)

    @pl.when(t == 0)
    def _():  # left of the sequence is zero padding
        win_ref[:, 0:HALO_BLK] = jnp.zeros((1, HALO_BLK), jnp.float32)

    @pl.when(t == n_t - 1)
    def _():  # right of the sequence is zero padding
        win_ref[:, HALO_BLK + tile_t:] = jnp.zeros((1, HALO_BLK), jnp.float32)

    # ---- hoisted boundary-mask ingredients (one iota per grid step) --------
    w0_out = tile_t + 2 * (halo - (K - 1) // 2 * dilations[0])   # widest layer output
    col = lax.broadcasted_iota(jnp.int32, (1, w0_out), 1)
    tile_start = t * tile_t

    act = None                      # f32 value (c_in, width) for layers >= 1
    width = tile_t + 2 * halo       # layer-0 logical input width
    h_rem = halo

    for l in range(n_layers):
        d = dilations[l]
        pad = (K - 1) // 2 * d
        w_out = width - 2 * pad
        h_rem -= pad
        c_out, c_in, r0 = layers_meta[l]

        b_l = p_ref[r0:r0 + c_out, bias_col:bias_col + 1]         # (c_out, 1)

        if c_in == 1:
            # First layer: contraction depth is only K -> K broadcasted VPU FMAs,
            # taps read directly from the VMEM window (no full-window value load).
            off0 = HALO_BLK - halo
            z = None
            for k in range(K):
                s = off0 + k * d
                xk = win_ref[:, s:s + w_out]                       # (1, w_out)
                wk = p_ref[r0:r0 + c_out, k:k + 1]                 # (c_out, 1)
                term = wk * xk                                     # (c_out, w_out)
                z = term if z is None else z + term
            z = z + b_l
        else:
            # K accumulated per-tap MXU matmuls (no tap concatenate -> bounded
            # vreg pressure). bf16 operands, single MXU pass/tap, f32 accumulate.
            act_bf = act.astype(jnp.bfloat16)
            z = None
            for k in range(K):
                wk = p_ref[r0:r0 + c_out,
                           k * c_in:(k + 1) * c_in].astype(jnp.bfloat16)
                xk = act_bf[:, k * d:k * d + w_out]                # (c_in, w_out)
                pk = jnp.dot(wk, xk, preferred_element_type=jnp.float32)
                z = pk if z is None else z + pk
            z = z + b_l

        if l < n_layers - 1:
            z = jnp.maximum(z, 0.2 * z)                            # LeakyReLU(0.2)
            # Re-impose the reference stack's per-layer zero padding: positions
            # outside the original [0, seq_len) must feed the next layer as zeros.
            orig = col[:, :w_out] + (tile_start - h_rem)
            z = jnp.where((orig >= 0) & (orig < seq_len), z, 0.0)

        act = z
        width = w_out

    out_ref[0] = act.astype(out_ref.dtype)   # (1, tile_t) lane-dense, unmasked store


def discriminator_forward(x, layer_params, kernel_size, tile_t=None):
    """Fused Discriminator forward.

    x            : (B, T) float32
    layer_params : list (length == Stacks) of {"v": (C_out, C_in, K), "g": (C_out,),
                   "b": (C_out,)} weight-norm conv params; layer 0 has C_in == 1,
                   the last layer has C_out == 1.
    returns      : (B, T)
    """
    B, T = x.shape
    n_layers = len(layer_params)
    assert kernel_size % 2 == 1, "odd kernel size required ('same' padding)"
    assert T % 128 == 0, "sequence length must be a multiple of 128"  # TODO(synk): ragged T

    # Dilations per the module: hidden layer i uses max(1, i); the last conv uses 1.
    dilations = tuple([max(1, i) for i in range(n_layers - 1)] + [1])
    halo = sum((kernel_size - 1) // 2 * d for d in dilations)
    assert halo <= HALO_BLK, "total conv halo must fit in one 128-lane block"

    if tile_t is None:
        # Largest 128-multiple tile the live-value footprint comfortably allows
        # (f32 activations + f32 accumulator stay within the 64-vreg budget at 1024).
        tile_t = 128
        for cand in (1024, 512, 256, 128):
            if T % cand == 0:
                tile_t = cand
                break
    assert T % tile_t == 0 and tile_t % 128 == 0
    n_t = T // tile_t
    tpb = tile_t // 128
    n_blk = T // 128

    # Fold weight_norm (g * v / ||v||, norm over (C_in, K)) and pack ALL layers'
    # weights (tap-major columns) + biases into ONE small array -> a single
    # constant-index operand stream instead of 2 * n_layers streams.
    max_cin = max(p["v"].shape[1] for p in layer_params)
    bias_col = kernel_size * max_cin
    layers_meta = []
    r = 0
    for p in layer_params:
        c_out, c_in, k = p["v"].shape
        assert k == kernel_size
        layers_meta.append((c_out, c_in, r))
        r += ((c_out + 7) // 8) * 8          # keep each layer's rows sublane-aligned
    n_rows = r

    params = jnp.zeros((n_rows, bias_col + 1), jnp.float32)
    for (c_out, c_in, r0), p in zip(layers_meta, layer_params):
        v, g, b = p["v"], p["g"], p["b"]
        norm = jnp.sqrt(jnp.sum(v * v, axis=(1, 2), keepdims=True))
        w = g[:, None, None] * (v / norm)                           # (C_out, C_in, K)
        w_cat = jnp.transpose(w, (0, 2, 1)).reshape(c_out, kernel_size * c_in)
        params = params.at[r0:r0 + c_out, 0:kernel_size * c_in].set(w_cat)
        params = params.at[r0:r0 + c_out, bias_col].set(b)

    x3 = x.reshape(B, 1, T)   # Unsqueeze(dim=1); NO padded HBM copy of the input.

    kernel = functools.partial(_discriminator_kernel, dilations, kernel_size,
                               tile_t, halo, T, tuple(layers_meta), bias_col)

    out = pl.pallas_call(
        kernel,
        out_shape=jax.ShapeDtypeStruct((B, 1, T), x.dtype),
        grid_spec=pltpu.PrefetchScalarGridSpec(
            num_scalar_prefetch=0,
            grid=(B, n_t),
            in_specs=[
                # left-neighbour 128-block (clamped at the left edge; zeroed in-kernel)
                pl.BlockSpec((1, 1, 128),
                             lambda b, t: (b, 0, jnp.maximum(t * tpb - 1, 0))),
                # body tile (read exactly once)
                pl.BlockSpec((1, 1, tile_t), lambda b, t: (b, 0, t)),
                # right-neighbour 128-block (clamped at the right edge; zeroed in-kernel)
                pl.BlockSpec((1, 1, 128),
                             lambda b, t: (b, 0, jnp.minimum((t + 1) * tpb, n_blk - 1))),
                # all conv weights + biases, one constant-index stream
                pl.BlockSpec((n_rows, bias_col + 1), lambda b, t: (0, 0)),
            ],
            out_specs=pl.BlockSpec((1, 1, tile_t), lambda b, t: (b, 0, t)),
            scratch_shapes=[pltpu.VMEM((1, tile_t + 2 * HALO_BLK), jnp.float32)],
        ),
        compiler_params=pltpu.CompilerParams(
            dimension_semantics=("parallel", "parallel"),
        ),
    )(x3, x3, x3, params)

    return out.reshape(B, T)


def _reference(x, layer_params, kernel_size):
    """Pure-JAX (lax.conv, f32 HIGHEST) reference matching the PyTorch forward."""
    n_layers = len(layer_params)
    dilations = [max(1, i) for i in range(n_layers - 1)] + [1]
    y = x[:, None, :]                                           # (B, 1, T)
    for l, p in enumerate(layer_params):
        v, g, b = p["v"], p["g"], p["b"]
        norm = jnp.sqrt(jnp.sum(v * v, axis=(1, 2), keepdims=True))
        w = g[:, None, None] * (v / norm)
        d = dilations[l]
        pad = (kernel_size - 1) // 2 * d
        y = lax.conv_general_dilated(
            y, w, window_strides=(1,), padding=[(pad, pad)],
            rhs_dilation=(d,), dimension_numbers=("NCH", "OIH", "NCH"),
            precision=lax.Precision.HIGHEST,
        ) + b[None, :, None]
        if l < n_layers - 1:
            y = jnp.where(y >= 0, y, 0.2 * y)                   # LeakyReLU(0.2)
    return y[:, 0, :]                                           # Squeeze(dim=1)


if __name__ == "__main__":
    # Discriminator hyperparameters (small, consistent with the module).
    stacks = 4            # hp_Dict['Discriminator']['Stacks']
    kernel_size = 3       # hp_Dict['Discriminator']['Kernel_Size']
    channels = 16         # hp_Dict['Discriminator']['Channels']
    B, T = 2, 768         # auto tile_t -> 256: exercises left edge, interior, right edge

    key = jax.random.PRNGKey(0)

    in_ch = [1] + [channels] * (stacks - 1)
    out_ch = [channels] * (stacks - 1) + [1]

    layer_params = []
    for l in range(stacks):
        key, kv, kg, kb = jax.random.split(key, 4)
        fan_in = in_ch[l] * kernel_size
        v = jax.random.normal(kv, (out_ch[l], in_ch[l], kernel_size),
                              jnp.float32) * math.sqrt(2.0 / fan_in)
        g = 1.0 + 0.1 * jax.random.normal(kg, (out_ch[l],), jnp.float32)
        b = 0.1 * jax.random.normal(kb, (out_ch[l],), jnp.float32)
        layer_params.append({"v": v, "g": g, "b": b})

    key, kx = jax.random.split(key)
    x = jax.random.normal(kx, (B, T), jnp.float32)

    out = discriminator_forward(x, layer_params, kernel_size)
    out = jax.block_until_ready(out)

    ref = _reference(x, layer_params, kernel_size)
    # Kernel uses single-pass bf16 MXU operands (f32 accumulation) per the perf
    # review; reference is f32/HIGHEST, so tolerance is set for bf16 operand error.
    np.testing.assert_allclose(np.asarray(out), np.asarray(ref),
                               rtol=2e-2, atol=5e-2)

    print("KERNEL_OK")
</pallas_src>

<mosaic_0001>
module attributes {stable_mosaic.version = 11 : i64} {
  func.func @_discriminator_kernel(%arg0: i32, %arg1: i32, %arg2: memref<1x1x128xf32, #tpu.memory_space<vmem>>, %arg3: memref<1x1x256xf32, #tpu.memory_space<vmem>>, %arg4: memref<1x1x128xf32, #tpu.memory_space<vmem>>, %arg5: memref<56x49xf32, #tpu.memory_space<vmem>>, %arg6: memref<1x1x256xf32, #tpu.memory_space<vmem>>, %arg7: memref<1x512xf32, #tpu.memory_space<vmem>>) attributes {dimension_semantics = [#tpu.dimension_semantics<parallel>, #tpu.dimension_semantics<parallel>], iteration_bounds = array<i64: 2, 3>, scalar_prefetch = 0 : i64, scratch_operands = 1 : i64, tpu.core_type = #tpu.core_type<tc>, window_params = [{transform_indices = @transform_0, window_bounds = array<i64: 1, 1, 128>}, {transform_indices = @transform_1, window_bounds = array<i64: 1, 1, 256>}, {transform_indices = @transform_2, window_bounds = array<i64: 1, 1, 128>}, {pipeline_mode = #tpu.pipeline_mode<synchronous>, transform_indices = @transform_3, window_bounds = array<i64: 56, 49>}, {transform_indices = @transform_4, window_bounds = array<i64: 1, 1, 256>}]} {
    %c0 = arith.constant 0 : index
    %c0_0 = arith.constant 0 : index
    %c0_1 = arith.constant 0 : index
    %0 = vector.load %arg2[%c0, %c0_0, %c0_1] : memref<1x1x128xf32, #tpu.memory_space<vmem>>, vector<1x1x128xf32>
    %1 = vector.shape_cast %0 : vector<1x1x128xf32> to vector<1x128xf32>
    %c0_2 = arith.constant 0 : index
    %c0_3 = arith.constant 0 : index
    %2 = vector.load %arg7[%c0_2, %c0_3] : memref<1x512xf32, #tpu.memory_space<vmem>>, vector<1x128xf32>
    tpu.vector_store %arg7[%c0_2, %c0_3], %1 {strides = array<i32>} : memref<1x512xf32, #tpu.memory_space<vmem>>, vector<1x128xf32>,
    %c0_4 = arith.constant 0 : index
    %c0_5 = arith.constant 0 : index
    %c0_6 = arith.constant 0 : index
    %3 = vector.load %arg3[%c0_4, %c0_5, %c0_6] : memref<1x1x256xf32, #tpu.memory_space<vmem>>, vector<1x1x256xf32>
    %4 = vector.shape_cast %3 : vector<1x1x256xf32> to vector<1x256xf32>
    %c0_7 = arith.constant 0 : index
    %c128 = arith.constant 128 : index
    %5 = vector.load %arg7[%c0_7, %c128] : memref<1x512xf32, #tpu.memory_space<vmem>>, vector<1x256xf32>
    tpu.vector_store %arg7[%c0_7, %c128], %4 {strides = array<i32>} : memref<1x512xf32, #tpu.memory_space<vmem>>, vector<1x256xf32>,
    %c0_8 = arith.constant 0 : index
    %c0_9 = arith.constant 0 : index
    %c0_10 = arith.constant 0 : index
    %6 = vector.load %arg4[%c0_8, %c0_9, %c0_10] : memref<1x1x128xf32, #tpu.memory_space<vmem>>, vector<1x1x128xf32>
    %7 = vector.shape_cast %6 : vector<1x1x128xf32> to vector<1x128xf32>
    %c0_11 = arith.constant 0 : index
    %c384 = arith.constant 384 : index
    %8 = vector.load %arg7[%c0_11, %c384] : memref<1x512xf32, #tpu.memory_space<vmem>>, vector<1x128xf32>
    tpu.vector_store %arg7[%c0_11, %c384], %7 {strides = array<i32>} : memref<1x512xf32, #tpu.memory_space<vmem>>, vector<1x128xf32>,
    %c0_i32 = arith.constant 0 : i32
    %9 = arith.cmpi eq, %arg1, %c0_i32 : i32
    %10 = arith.extui %9 : i1 to i32
    %c0_i32_12 = arith.constant 0 : i32
    %11 = arith.cmpi ne, %10, %c0_i32_12 : i32
    scf.if %11 {
      %cst_66 = arith.constant 0.000000e+00 : f32
      %141 = vector.broadcast %cst_66 : f32 to vector<1x128xf32>
      %c0_67 = arith.constant 0 : index
      %c0_68 = arith.constant 0 : index
      %142 = vector.load %arg7[%c0_67, %c0_68] : memref<1x512xf32, #tpu.memory_space<vmem>>, vector<1x128xf32>
      tpu.vector_store %arg7[%c0_67, %c0_68], %141 {strides = array<i32>} : memref<1x512xf32, #tpu.memory_space<vmem>>, vector<1x128xf32>,
    } else {
    }
    %c2_i32 = arith.constant 2 : i32
    %12 = arith.cmpi eq, %arg1, %c2_i32 : i32
    %13 = arith.extui %12 : i1 to i32
    %c0_i32_13 = arith.constant 0 : i32
    %14 = arith.cmpi ne, %13, %c0_i32_13 : i32
    scf.if %14 {
      %cst_66 = arith.constant 0.000000e+00 : f32
      %141 = vector.broadcast %cst_66 : f32 to vector<1x128xf32>
      %c0_67 = arith.constant 0 : index
      %c384_68 = arith.constant 384 : index
      %142 = vector.load %arg7[%c0_67, %c384_68] : memref<1x512xf32, #tpu.memory_space<vmem>>, vector<1x128xf32>
      tpu.vector_store %arg7[%c0_67, %c384_68], %141 {strides = array<i32>} : memref<1x512xf32, #tpu.memory_space<vmem>>, vector<1x128xf32>,
    } else {
    }
    %15 = tpu.iota {dimensions = array<i32: 1>} : vector<1x264xi32>
    %c256_i32 = arith.constant 256 : i32
    %16 = arith.muli %arg1, %c256_i32 : i32
    %c0_14 = arith.constant 0 : index
    %c48 = arith.constant 48 : index
    %17 = vector.load %arg5[%c0_14, %c48] : memref<56x49xf32, #tpu.memory_space<vmem>>, vector<16x1xf32>
    %c0_15 = arith.constant 0 : index
    %c123 = arith.constant 123 : index
    %18 = vector.load %arg7[%c0_15, %c123] : memref<1x512xf32, #tpu.memory_space<vmem>>, vector<1x264xf32>
    %c0_16 = arith.constant 0 : index
    %c0_17 = arith.constant 0 : index
    %19 = vector.load %arg5[%c0_16, %c0_17] : memref<56x49xf32, #tpu.memory_space<vmem>>, vector<16x1xf32>
    %20 = vector.broadcast %19 : vector<16x1xf32> to vector<16x264xf32>
    %21 = vector.broadcast %18 : vector<1x264xf32> to vector<16x264xf32>
    %22 = arith.mulf %20, %21 : vector<16x264xf32>
    %c0_18 = arith.constant 0 : index
    %c124 = arith.constant 124 : index
    %23 = vector.load %arg7[%c0_18, %c124] : memref<1x512xf32, #tpu.memory_space<vmem>>, vector<1x264xf32>
    %c0_19 = arith.constant 0 : index
    %c1 = arith.constant 1 : index
    %24 = vector.load %arg5[%c0_19, %c1] : memref<56x49xf32, #tpu.memory_space<vmem>>, vector<16x1xf32>
    %25 = vector.broadcast %24 : vector<16x1xf32> to vector<16x264xf32>
    %26 = vector.broadcast %23 : vector<1x264xf32> to vector<16x264xf32>
    %27 = arith.mulf %25, %26 : vector<16x264xf32>
    %28 = arith.addf %22, %27 : vector<16x264xf32>
    %c0_20 = arith.constant 0 : index
    %c125 = arith.constant 125 : index
    %29 = vector.load %arg7[%c0_20, %c125] : memref<1x512xf32, #tpu.memory_space<vmem>>, vector<1x264xf32>
    %c0_21 = arith.constant 0 : index
    %c2 = arith.constant 2 : index
    %30 = vector.load %arg5[%c0_21, %c2] : memref<56x49xf32, #tpu.memory_space<vmem>>, vector<16x1xf32>
    %31 = vector.broadcast %30 : vector<16x1xf32> to vector<16x264xf32>
    %32 = vector.broadcast %29 : vector<1x264xf32> to vector<16x264xf32>
    %33 = arith.mulf %31, %32 : vector<16x264xf32>
    %34 = arith.addf %28, %33 : vector<16x264xf32>
    %35 = vector.broadcast %17 : vector<16x1xf32> to vector<16x264xf32>
    %36 = arith.addf %34, %35 : vector<16x264xf32>
    %cst = arith.constant 2.000000e-01 : f32
    %37 = vector.broadcast %cst : f32 to vector<16x264xf32>
    %38 = arith.mulf %37, %36 : vector<16x264xf32>
    %39 = arith.maximumf %36, %38 : vector<16x264xf32>
    %c4_i32 = arith.constant 4 : i32
    %40 = arith.subi %16, %c4_i32 : i32
    %41 = vector.broadcast %40 : i32 to vector<1x264xi32>
    %42 = arith.addi %15, %41 : vector<1x264xi32>
    %c0_i32_22 = arith.constant 0 : i32
    %43 = vector.broadcast %c0_i32_22 : i32 to vector<1x264xi32>
    %44 = arith.cmpi sge, %42, %43 : vector<1x264xi32>
    %c768_i32 = arith.constant 768 : i32
    %45 = vector.broadcast %c768_i32 : i32 to vector<1x264xi32>
    %46 = arith.cmpi slt, %42, %45 : vector<1x264xi32>
    %47 = arith.andi %44, %46 : vector<1x264xi1>
    %cst_23 = arith.constant 0.000000e+00 : f32
    %48 = vector.shape_cast %47 : vector<1x264xi1> to vector<1x264xi1>
    %49 = vector.broadcast %48 : vector<1x264xi1> to vector<16x264xi1>
    %50 = vector.broadcast %cst_23 : f32 to vector<16x264xf32>
    %51 = arith.select %49, %39, %50 : vector<16x264xi1>, vector<16x264xf32>
    %c16 = arith.constant 16 : index
    %c48_24 = arith.constant 48 : index
    %52 = vector.load %arg5[%c16, %c48_24] : memref<56x49xf32, #tpu.memory_space<vmem>>, vector<16x1xf32>
    %53 = arith.truncf %51 : vector<16x264xf32> to vector<16x264xbf16>
    %c16_25 = arith.constant 16 : index
    %c0_26 = arith.constant 0 : index
    %54 = vector.load %arg5[%c16_25, %c0_26] : memref<56x49xf32, #tpu.memory_space<vmem>>, vector<16x16xf32>
    %55 = arith.truncf %54 : vector<16x16xf32> to vector<16x16xbf16>
    %56 = vector.extract_strided_slice %53 {offsets = [0, 0], sizes = [16, 262], strides = [1, 1]} : vector<16x264xbf16> to vector<16x262xbf16>
    %cst_27 = arith.constant dense<0.000000e+00> : vector<16x262xf32>
    %57 = tpu.matmul %55, %56, %cst_27 {dimension_numbers = #tpu.dot_dimension_numbers<[1], [0], [0], [1], [0, 0, 1, 1], [], []>} : vector<16x16xbf16>, vector<16x262xbf16>, vector<16x262xf32> -> vector<16x262xf32>
    %c16_28 = arith.constant 16 : index
    %c16_29 = arith.constant 16 : index
    %58 = vector.load %arg5[%c16_28, %c16_29] : memref<56x49xf32, #tpu.memory_space<vmem>>, vector<16x16xf32>
    %59 = arith.truncf %58 : vector<16x16xf32> to vector<16x16xbf16>
    %60 = vector.extract_strided_slice %53 {offsets = [0, 1], sizes = [16, 262], strides = [1, 1]} : vector<16x264xbf16> to vector<16x262xbf16>
    %cst_30 = arith.constant dense<0.000000e+00> : vector<16x262xf32>
    %61 = tpu.matmul %59, %60, %cst_30 {dimension_numbers = #tpu.dot_dimension_numbers<[1], [0], [0], [1], [0, 0, 1, 1], [], []>} : vector<16x16xbf16>, vector<16x262xbf16>, vector<16x262xf32> -> vector<16x262xf32>
    %62 = arith.addf %57, %61 : vector<16x262xf32>
    %c16_31 = arith.constant 16 : index
    %c32 = arith.constant 32 : index
    %63 = vector.load %arg5[%c16_31, %c32] : memref<56x49xf32, #tpu.memory_space<vmem>>, vector<16x16xf32>
    %64 = arith.truncf %63 : vector<16x16xf32> to vector<16x16xbf16>
    %65 = vector.extract_strided_slice %53 {offsets = [0, 2], sizes = [16, 262], strides = [1, 1]} : vector<16x264xbf16> to vector<16x262xbf16>
    %cst_32 = arith.constant dense<0.000000e+00> : vector<16x262xf32>
    %66 = tpu.matmul %64, %65, %cst_32 {dimension_numbers = #tpu.dot_dimension_numbers<[1], [0], [0], [1], [0, 0, 1, 1], [], []>} : vector<16x16xbf16>, vector<16x262xbf16>, vector<16x262xf32> -> vector<16x262xf32>
    %67 = arith.addf %62, %66 : vector<16x262xf32>
    %68 = vector.broadcast %52 : vector<16x1xf32> to vector<16x262xf32>
    %69 = arith.addf %67, %68 : vector<16x262xf32>
    %cst_33 = arith.constant 2.000000e-01 : f32
    %70 = vector.broadcast %cst_33 : f32 to vector<16x262xf32>
    %71 = arith.mulf %70, %69 : vector<16x262xf32>
    %72 = arith.maximumf %69, %71 : vector<16x262xf32>
    %73 = vector.extract_strided_slice %15 {offsets = [0, 0], sizes = [1, 262], strides = [1, 1]} : vector<1x264xi32> to vector<1x262xi32>
    %c3_i32 = arith.constant 3 : i32
    %74 = arith.subi %16, %c3_i32 : i32
    %75 = vector.broadcast %74 : i32 to vector<1x262xi32>
    %76 = arith.addi %73, %75 : vector<1x262xi32>
    %c0_i32_34 = arith.constant 0 : i32
    %77 = vector.broadcast %c0_i32_34 : i32 to vector<1x262xi32>
    %78 = arith.cmpi sge, %76, %77 : vector<1x262xi32>
    %c768_i32_35 = arith.constant 768 : i32
    %79 = vector.broadcast %c768_i32_35 : i32 to vector<1x262xi32>
    %80 = arith.cmpi slt, %76, %79 : vector<1x262xi32>
    %81 = arith.andi %78, %80 : vector<1x262xi1>
    %cst_36 = arith.constant 0.000000e+00 : f32
    %82 = vector.shape_cast %81 : vector<1x262xi1> to vector<1x262xi1>
    %83 = vector.broadcast %82 : vector<1x262xi1> to vector<16x262xi1>
    %84 = vector.broadcast %cst_36 : f32 to vector<16x262xf32>
    %85 = arith.select %83, %72, %84 : vector<16x262xi1>, vector<16x262xf32>
    %c32_37 = arith.constant 32 : index
    %c48_38 = arith.constant 48 : index
    %86 = vector.load %arg5[%c32_37, %c48_38] : memref<56x49xf32, #tpu.memory_space<vmem>>, vector<16x1xf32>
    %87 = arith.truncf %85 : vector<16x262xf32> to vector<16x262xbf16>
    %c32_39 = arith.constant 32 : index
    %c0_40 = arith.constant 0 : index
    %88 = vector.load %arg5[%c32_39, %c0_40] : memref<56x49xf32, #tpu.memory_space<vmem>>, vector<16x16xf32>
    %89 = arith.truncf %88 : vector<16x16xf32> to vector<16x16xbf16>
    %90 = vector.extract_strided_slice %87 {offsets = [0, 0], sizes = [16, 258], strides = [1, 1]} : vector<16x262xbf16> to vector<16x258xbf16>
    %cst_41 = arith.constant dense<0.000000e+00> : vector<16x258xf32>
    %91 = tpu.matmul %89, %90, %cst_41 {dimension_numbers = #tpu.dot_dimension_numbers<[1], [0], [0], [1], [0, 0, 1, 1], [], []>} : vector<16x16xbf16>, vector<16x258xbf16>, vector<16x258xf32> -> vector<16x258xf32>
    %c32_42 = arith.constant 32 : index
    %c16_43 = arith.constant 16 : index
    %92 = vector.load %arg5[%c32_42, %c16_43] : memref<56x49xf32, #tpu.memory_space<vmem>>, vector<16x16xf32>
    %93 = arith.truncf %92 : vector<16x16xf32> to vector<16x16xbf16>
    %94 = vector.extract_strided_slice %87 {offsets = [0, 2], sizes = [16, 258], strides = [1, 1]} : vector<16x262xbf16> to vector<16x258xbf16>
    %cst_44 = arith.constant dense<0.000000e+00> : vector<16x258xf32>
    %95 = tpu.matmul %93, %94, %cst_44 {dimension_numbers = #tpu.dot_dimension_numbers<[1], [0], [0], [1], [0, 0, 1, 1], [], []>} : vector<16x16xbf16>, vector<16x258xbf16>, vector<16x258xf32> -> vector<16x258xf32>
    %96 = arith.addf %91, %95 : vector<16x258xf32>
    %c32_45 = arith.constant 32 : index
    %c32_46 = arith.constant 32 : index
    %97 = vector.load %arg5[%c32_45, %c32_46] : memref<56x49xf32, #tpu.memory_space<vmem>>, vector<16x16xf32>
    %98 = arith.truncf %97 : vector<16x16xf32> to vector<16x16xbf16>
    %99 = vector.extract_strided_slice %87 {offsets = [0, 4], sizes = [16, 258], strides = [1, 1]} : vector<16x262xbf16> to vector<16x258xbf16>
    %cst_47 = arith.constant dense<0.000000e+00> : vector<16x258xf32>
    %100 = tpu.matmul %98, %99, %cst_47 {dimension_numbers = #tpu.dot_dimension_numbers<[1], [0], [0], [1], [0, 0, 1, 1], [], []>} : vector<16x16xbf16>, vector<16x258xbf16>, vector<16x258xf32> -> vector<16x258xf32>
    %101 = arith.addf %96, %100 : vector<16x258xf32>
    %102 = vector.broadcast %86 : vector<16x1xf32> to vector<16x258xf32>
    %103 = arith.addf %101, %102 : vector<16x258xf32>
    %cst_48 = arith.constant 2.000000e-01 : f32
    %104 = vector.broadcast %cst_48 : f32 to vector<16x258xf32>
    %105 = arith.mulf %104, %103 : vector<16x258xf32>
    %106 = arith.maximumf %103, %105 : vector<16x258xf32>
    %107 = vector.extract_strided_slice %15 {offsets = [0, 0], sizes = [1, 258], strides = [1, 1]} : vector<1x264xi32> to vector<1x258xi32>
    %c1_i32 = arith.constant 1 : i32
    %108 = arith.subi %16, %c1_i32 : i32
    %109 = vector.broadcast %108 : i32 to vector<1x258xi32>
    %110 = arith.addi %107, %109 : vector<1x258xi32>
    %c0_i32_49 = arith.constant 0 : i32
    %111 = vector.broadcast %c0_i32_49 : i32 to vector<1x258xi32>
    %112 = arith.cmpi sge, %110, %111 : vector<1x258xi32>
    %c768_i32_50 = arith.constant 768 : i32
    %113 = vector.broadcast %c768_i32_50 : i32 to vector<1x258xi32>
    %114 = arith.cmpi slt, %110, %113 : vector<1x258xi32>
    %115 = arith.andi %112, %114 : vector<1x258xi1>
    %cst_51 = arith.constant 0.000000e+00 : f32
    %116 = vector.shape_cast %115 : vector<1x258xi1> to vector<1x258xi1>
    %117 = vector.broadcast %116 : vector<1x258xi1> to vector<16x258xi1>
    %118 = vector.broadcast %cst_51 : f32 to vector<16x258xf32>
    %119 = arith.select %117, %106, %118 : vector<16x258xi1>, vector<16x258xf32>
    %c48_52 = arith.constant 48 : index
    %c48_53 = arith.constant 48 : index
    %120 = vector.load %arg5[%c48_52, %c48_53] : memref<56x49xf32, #tpu.memory_space<vmem>>, vector<1x1xf32>
    %121 = arith.truncf %119 : vector<16x258xf32> to vector<16x258xbf16>
    %c48_54 = arith.constant 48 : index
    %c0_55 = arith.constant 0 : index
    %122 = vector.load %arg5[%c48_54, %c0_55] : memref<56x49xf32, #tpu.memory_space<vmem>>, vector<1x16xf32>
    %123 = arith.truncf %122 : vector<1x16xf32> to vector<1x16xbf16>
    %124 = vector.extract_strided_slice %121 {offsets = [0, 0], sizes = [16, 256], strides = [1, 1]} : vector<16x258xbf16> to vector<16x256xbf16>
    %cst_56 = arith.constant dense<0.000000e+00> : vector<1x256xf32>
    %125 = tpu.matmul %123, %124, %cst_56 {dimension_numbers = #tpu.dot_dimension_numbers<[1], [0], [0], [1], [0, 0, 1, 1], [], []>} : vector<1x16xbf16>, vector<16x256xbf16>, vector<1x256xf32> -> vector<1x256xf32>
    %c48_57 = arith.constant 48 : index
    %c16_58 = arith.constant 16 : index
    %126 = vector.load %arg5[%c48_57, %c16_58] : memref<56x49xf32, #tpu.memory_space<vmem>>, vector<1x16xf32>
    %127 = arith.truncf %126 : vector<1x16xf32> to vector<1x16xbf16>
    %128 = vector.extract_strided_slice %121 {offsets = [0, 1], sizes = [16, 256], strides = [1, 1]} : vector<16x258xbf16> to vector<16x256xbf16>
    %cst_59 = arith.constant dense<0.000000e+00> : vector<1x256xf32>
    %129 = tpu.matmul %127, %128, %cst_59 {dimension_numbers = #tpu.dot_dimension_numbers<[1], [0], [0], [1], [0, 0, 1, 1], [], []>} : vector<1x16xbf16>, vector<16x256xbf16>, vector<1x256xf32> -> vector<1x256xf32>
    %130 = arith.addf %125, %129 : vector<1x256xf32>
    %c48_60 = arith.constant 48 : index
    %c32_61 = arith.constant 32 : index
    %131 = vector.load %arg5[%c48_60, %c32_61] : memref<56x49xf32, #tpu.memory_space<vmem>>, vector<1x16xf32>
    %132 = arith.truncf %131 : vector<1x16xf32> to vector<1x16xbf16>
    %133 = vector.extract_strided_slice %121 {offsets = [0, 2], sizes = [16, 256], strides = [1, 1]} : vector<16x258xbf16> to vector<16x256xbf16>
    %cst_62 = arith.constant dense<0.000000e+00> : vector<1x256xf32>
    %134 = tpu.matmul %132, %133, %cst_62 {dimension_numbers = #tpu.dot_dimension_numbers<[1], [0], [0], [1], [0, 0, 1, 1], [], []>} : vector<1x16xbf16>, vector<16x256xbf16>, vector<1x256xf32> -> vector<1x256xf32>
    %135 = arith.addf %130, %134 : vector<1x256xf32>
    %136 = vector.broadcast %120 : vector<1x1xf32> to vector<1x256xf32>
    %137 = arith.addf %135, %136 : vector<1x256xf32>
    %c0_63 = arith.constant 0 : index
    %c0_64 = arith.constant 0 : index
    %c0_65 = arith.constant 0 : index
    %138 = vector.load %arg6[%c0_63, %c0_64, %c0_65] : memref<1x1x256xf32, #tpu.memory_space<vmem>>, vector<1x1x256xf32>
    %139 = vector.shape_cast %138 : vector<1x1x256xf32> to vector<1x256xf32>
    %140 = vector.shape_cast %137 : vector<1x256xf32> to vector<1x1x256xf32>
    tpu.vector_store %arg6[%c0_63, %c0_64, %c0_65], %140 {strides = array<i32>} : memref<1x1x256xf32, #tpu.memory_space<vmem>>, vector<1x1x256xf32>,
    return
  }
  func.func @transform_0(%arg0: i32, %arg1: i32) -> (i32, i32, i32) {
    %c2_i32 = arith.constant 2 : i32
    %0 = arith.muli %arg1, %c2_i32 : i32
    %c1_i32 = arith.constant 1 : i32
    %1 = arith.subi %0, %c1_i32 : i32
    %c0_i32 = arith.constant 0 : i32
    %2 = arith.maxsi %1, %c0_i32 : i32
    %c0_i32_0 = arith.constant 0 : i32
    %c0_i32_1 = arith.constant 0 : i32
    return %arg0, %c0_i32_0, %2 : i32, i32, i32
  }
  func.func @transform_1(%arg0: i32, %arg1: i32) -> (i32, i32, i32) {
    %c0_i32 = arith.constant 0 : i32
    %c0_i32_0 = arith.constant 0 : i32
    return %arg0, %c0_i32, %arg1 : i32, i32, i32
  }
  func.func @transform_2(%arg0: i32, %arg1: i32) -> (i32, i32, i32) {
    %c1_i32 = arith.constant 1 : i32
    %0 = arith.addi %arg1, %c1_i32 : i32
    %c2_i32 = arith.constant 2 : i32
    %1 = arith.muli %0, %c2_i32 : i32
    %c5_i32 = arith.constant 5 : i32
    %2 = arith.minsi %1, %c5_i32 : i32
    %c0_i32 = arith.constant 0 : i32
    %c0_i32_0 = arith.constant 0 : i32
    return %arg0, %c0_i32, %2 : i32, i32, i32
  }
  func.func @transform_3(%arg0: i32, %arg1: i32) -> (i32, i32) {
    %c0_i32 = arith.constant 0 : i32
    %c0_i32_0 = arith.constant 0 : i32
    %c0_i32_1 = arith.constant 0 : i32
    return %c0_i32, %c0_i32_0 : i32, i32
  }
  func.func @transform_4(%arg0: i32, %arg1: i32) -> (i32, i32, i32) {
    %c0_i32 = arith.constant 0 : i32
    %c0_i32_0 = arith.constant 0 : i32
    return %arg0, %c0_i32, %arg1 : i32, i32, i32
  }
}

</mosaic_0001>

<llo_original>
// kernel: tpu_custom_call.1
$region0: #{tpu_custom_call.1}
  #allocation0 [shape = 'u32[]', space=smem, size = 0x4, offset = 0x4, fixed_abs, tag = 'smem constant byte address 0x4 - core index']
  #allocation1 [shape = 'u32[144,128]{1,0:T(1,128)}', space=vmem, size = 0x12000, scoped, tag = 'internal scratch']
  #allocation2 [shape = 'f32[1,512]{1,0:T(1,128)}', space=vmem, size = 0x800, scoped, tag = 'scratch operand']
  %s0 = inlined_call_operand.hbm [shape: f32[2,1,768], index: 0, kind: input, shape index: {}]
  %s1 = inlined_call_operand.hbm [shape: f32[2,1,768], index: 1, kind: input, shape index: {}]
  %s2 = inlined_call_operand.hbm [shape: f32[2,1,768], index: 2, kind: input, shape index: {}]
  %s3 = inlined_call_operand.hbm [shape: f32[56,49], index: 3, kind: input, shape index: {}]
  %s4 = inlined_call_operand.hbm [shape: f32[2,1,768], index: 4, kind: output, shape index: {}]
  %s5 = sld [smem:[#allocation0]]
  $region73: #{tpu_custom_call.1} parent=0
    _
  %s7 = ssub.s32 1, %s5
  %s8 = scalar_select 0, %s7, %s5
  $region1: #{tpu_custom_call.1} parent=0
    #allocation3 [shape = 'u8[1024]{0}', space=vmem, size = 0x400, scoped, tag = 'input window, operand 0']
    #allocation4 [shape = 's32[2]{0}', space=sflag, size = 0x8, scoped, tag = 'scoped memory for tpu_custom_call.1']
    #allocation5 [shape = 's32[2]{0}', space=sflag, size = 0x8, scoped, tag = 'scoped memory for tpu_custom_call.1']
    #allocation6 [shape = 'u8[2048]{0}', space=vmem, size = 0x800, scoped, tag = 'input window, operand 1']
    #allocation7 [shape = 's32[2]{0}', space=sflag, size = 0x8, scoped, tag = 'scoped memory for tpu_custom_call.1']
    #allocation8 [shape = 'u8[1024]{0}', space=vmem, size = 0x400, scoped, tag = 'input window, operand 2']
    #allocation9 [shape = 'u8[28672]{0}', space=vmem, size = 0x7000, scoped, tag = 'input window, operand 3, single buffered']
    #allocation10 [shape = 's32[1]{0}', space=sflag, size = 0x4, scoped, tag = 'scoped memory for tpu_custom_call.1']
    #allocation11 [shape = 'u8[2048]{0}', space=vmem, size = 0x800, scoped, tag = 'output window, operand 0']
    %9 = vsyncpa [#allocation4], 0
    %s10 = scalar_lea.sflag [#allocation4], 1
    %11 = vsyncpa %s10, 0
    %12 = vsyncpa [#allocation7], 0
    %s13 = scalar_lea.sflag [#allocation7], 1
    %14 = vsyncpa %s13, 0
    %15 = vsyncpa [#allocation10], 0
    %16 = vsyncpa [#allocation5], 0
    %s17 = scalar_lea.sflag [#allocation5], 1
    %18 = vsyncpa %s17, 0
    loop: start=0, step=1, limit=8
    $region2: #{tpu_custom_call.1} parent=1 // loop_pre_header
      _
    $region3: #{tpu_custom_call.1} parent=1 // loop_header
      %s20 = sphi 0, %s24
      %p21 = scmp.ge.s32.totalorder %s20, 8
      %s27 = sphi 0, %s39
      %s28 = sphi 0, %s35
      %s29 = sphi 0, %s27
      %s30 = sphi 0, %s28
      %s31 = sphi 0, %s29
      %s32 = sphi 0, %s30
      %s52 = sphi 0, %s54
      %s55 = sphi 0, %s52
      %s56 = sphi 0, %s55
      %s72 = sphi 0, %s56
      %s80 = sphi 0, %s82
      %s83 = sphi 0, %s80
      %s84 = sphi 0, %s83
      %s100 = sphi 0, %s84
      %s116 = sphi 0, %s118
      %s119 = sphi 0, %s116
      %s120 = sphi 0, %s119
      %s136 = sphi 0, %s120
      %s140 = sphi 0, %s140
      %s142 = sphi 0, %s140
      %s143 = sphi 0, %s142
      %s157 = sphi 0, %s143
      %s165 = sphi 0, %s167
      %s168 = sphi 0, %s165
      %s169 = sphi 0, %s168
      %s185 = sphi 0, %s169
    $region4: #{tpu_custom_call.1} parent=1 // loop_header_branch
      %23 = sbr.rel (%p21) target = $region8
    $region5: #{tpu_custom_call.1} parent=1 // loop_body
      %s25 = ssub.s32 %s20, 1
      %s26 = ssub.s32 %s20, 2
      %s33 = sadd.s32 1, %s28
      %p34 = scmp.ge.s32.totalorder %s33, 3
      %s35 = scalar_select %p34, 0, %s33
      %s36 = sadd.s32 1, %s27
      %s37 = scalar_select %p34, %s36, %s27
      %p38 = scmp.ge.s32.totalorder %s37, 2
      %s39 = scalar_select %p38, 0, %s37
      %s40 = smul.u32 %s28, 2
      %s41 = ssub.s32 %s40, 1
      %p42 = scmp.gt.s32.totalorder %s41, 0
      %s43 = scalar_select %p42, %s41, 0
      %s44 = smul.u32 %s35, 2
      %s45 = ssub.s32 %s44, 1
      %p46 = scmp.gt.s32.totalorder %s45, 0
      %s47 = scalar_select %p46, %s45, 0
      %s48 = ssub.s32 %s27, %s39
      %s49 = ssub.s32 %s43, %s47
      %s50 = sor.u32 %s48, %s49
      %p51 = scmp.eq.s32.totalorder %s50, 0
      %s53 = sadd.s32 %s52, 1
      %s54 = scalar_select %p51, %s52, %s53
      %p57 = pneg %p51
      %p58 = scmp.eq.s32.totalorder %s20, 5
      %p59 = por %p57, %p58
      %p60 = scmp.ne.s32.totalorder %s52, %s55
      %p61 = scmp.eq.s32.totalorder %s20, 0
      %p62 = por %p60, %p61
      %p63 = scmp.ne.s32.totalorder %s52, %s55
      %p64 = scmp.eq.s32.totalorder %s25, 5
      %p65 = por %p63, %p64
      %p66 = scmp.ne.s32.totalorder %s55, %s56
      %p67 = scmp.eq.s32.totalorder %s25, 0
      %p68 = por %p66, %p67
      %p69 = scmp.ne.s32.totalorder %s55, %s56
      %p70 = scmp.eq.s32.totalorder %s26, 5
      %p71 = por %p69, %p70
      %p73 = scmp.ne.s32.totalorder %s56, %s72
      %p74 = scmp.eq.s32.totalorder %s26, 0
      %p75 = por %p73, %p74
      %s76 = ssub.s32 %s27, %s39
      %s77 = ssub.s32 %s28, %s35
      %s78 = sor.u32 %s76, %s77
      %p79 = scmp.eq.s32.totalorder %s78, 0
      %s81 = sadd.s32 %s80, 1
      %s82 = scalar_select %p79, %s80, %s81
      %p85 = pneg %p79
      %p86 = scmp.eq.s32.totalorder %s20, 5
      %p87 = por %p85, %p86
      %p88 = scmp.ne.s32.totalorder %s80, %s83
      %p89 = scmp.eq.s32.totalorder %s20, 0
      %p90 = por %p88, %p89
      %p91 = scmp.ne.s32.totalorder %s80, %s83
      %p92 = scmp.eq.s32.totalorder %s25, 5
      %p93 = por %p91, %p92
      %p94 = scmp.ne.s32.totalorder %s83, %s84
      %p95 = scmp.eq.s32.totalorder %s25, 0
      %p96 = por %p94, %p95
      %p97 = scmp.ne.s32.totalorder %s83, %s84
      %p98 = scmp.eq.s32.totalorder %s26, 5
      %p99 = por %p97, %p98
      %p101 = scmp.ne.s32.totalorder %s84, %s100
      %p102 = scmp.eq.s32.totalorder %s26, 0
      %p103 = por %p101, %p102
      %s104 = sadd.s32 %s28, 1
      %s105 = smul.u32 %s104, 2
      %p106 = scmp.lt.s32.totalorder %s105, 5
      %s107 = scalar_select %p106, %s105, 5
      %s108 = sadd.s32 %s35, 1
      %s109 = smul.u32 %s108, 2
      %p110 = scmp.lt.s32.totalorder %s109, 5
      %s111 = scalar_select %p110, %s109, 5
      %s112 = ssub.s32 %s27, %s39
      %s113 = ssub.s32 %s107, %s111
      %s114 = sor.u32 %s112, %s113
      %p115 = scmp.eq.s32.totalorder %s114, 0
      %s117 = sadd.s32 %s116, 1
      %s118 = scalar_select %p115, %s116, %s117
      %p121 = pneg %p115
      %p122 = scmp.eq.s32.totalorder %s20, 5
      %p123 = por %p121, %p122
      %p124 = scmp.ne.s32.totalorder %s116, %s119
      %p125 = scmp.eq.s32.totalorder %s20, 0
      %p126 = por %p124, %p125
      %p127 = scmp.ne.s32.totalorder %s116, %s119
      %p128 = scmp.eq.s32.totalorder %s25, 5
      %p129 = por %p127, %p128
      %p130 = scmp.ne.s32.totalorder %s119, %s120
      %p131 = scmp.eq.s32.totalorder %s25, 0
      %p132 = por %p130, %p131
      %p133 = scmp.ne.s32.totalorder %s119, %s120
      %p134 = scmp.eq.s32.totalorder %s26, 5
      %p135 = por %p133, %p134
      %p137 = scmp.ne.s32.totalorder %s120, %s136
      %p138 = scmp.eq.s32.totalorder %s26, 0
      %p139 = por %p137, %p138
      %s141 = sadd.s32 %s140, 1
      %p144 = scmp.eq.s32.totalorder %s20, 5
      %p145 = scmp.ne.s32.totalorder %s140, %s142
      %p146 = scmp.eq.s32.totalorder %s20, 0
      %p147 = por %p145, %p146
      %p148 = scmp.ne.s32.totalorder %s140, %s142
      %p149 = scmp.eq.s32.totalorder %s25, 5
      %p150 = por %p148, %p149
      %p151 = scmp.ne.s32.totalorder %s142, %s143
      %p152 = scmp.eq.s32.totalorder %s25, 0
      %p153 = por %p151, %p152
      %p154 = scmp.ne.s32.totalorder %s142, %s143
      %p155 = scmp.eq.s32.totalorder %s26, 5
      %p156 = por %p154, %p155
      %p158 = scmp.ne.s32.totalorder %s143, %s157
      %p159 = scmp.eq.s32.totalorder %s26, 0
      %p160 = por %p158, %p159
      %s161 = ssub.s32 %s27, %s39
      %s162 = ssub.s32 %s28, %s35
      %s163 = sor.u32 %s161, %s162
      %p164 = scmp.eq.s32.totalorder %s163, 0
      %s166 = sadd.s32 %s165, 1
      %s167 = scalar_select %p164, %s165, %s166
      %p170 = pneg %p164
      %p171 = scmp.eq.s32.totalorder %s20, 5
      %p172 = por %p170, %p171
      %p173 = scmp.ne.s32.totalorder %s165, %s168
      %p174 = scmp.eq.s32.totalorder %s20, 0
      %p175 = por %p173, %p174
      %p176 = scmp.ne.s32.totalorder %s165, %s168
      %p177 = scmp.eq.s32.totalorder %s25, 5
      %p178 = por %p176, %p177
      %p179 = scmp.ne.s32.totalorder %s168, %s169
      %p180 = scmp.eq.s32.totalorder %s25, 0
      %p181 = por %p179, %p180
      %p182 = scmp.ne.s32.totalorder %s168, %s169
      %p183 = scmp.eq.s32.totalorder %s26, 5
      %p184 = por %p182, %p183
      %p186 = scmp.ne.s32.totalorder %s169, %s185
      %p187 = scmp.eq.s32.totalorder %s26, 0
      %p188 = por %p186, %p187
      %p189 = scmp.le.s32.totalorder 1, %s20
      %p190 = scmp.lt.s32.totalorder %s20, 7
      %p191 = pnand %p189, %p190
      %p192 = pneg %p191
      // Predicated region
      $region9: #{tpu_custom_call.1} parent=5 // pred_check
        _
      $region10: #{tpu_custom_call.1} parent=5 // pred_check_branch
        %194 = sbr.rel (%p191) target = $region12
      $region11: #{tpu_custom_call.1} parent=5 // pred_region
        %s195 = ssub.s32 %s20, 1
        // Predicated region
        $region13: #{tpu_custom_call.1} parent=11 // pred_check
          %p196 = pneg %p153
        $region14: #{tpu_custom_call.1} parent=11 // pred_check_branch
          %198 = sbr.rel (%p196) target = $region16
        $region15: #{tpu_custom_call.1} parent=11 // pred_region
          %s200 = ssub.s32 896, 896
          %201 = vsyncadd [#allocation10], %s200
          %s202 = sshll.u32 [#allocation9], 4
          %s203 = int_to_ptr.vmem [resolvable:$true] %s202
          %208 = dma.hbm_to_vmem [thread:$0]  %s3, 896, %s203, [#allocation10], 128, 128, 8
        $region16: #{tpu_custom_call.1} parent=11 // pred_fallthru
          _
      $region12: #{tpu_custom_call.1} parent=5 // pred_fallthru
        _
      %p209 = scmp.lt.s32.totalorder %s20, 6
      // Predicated region
      $region17: #{tpu_custom_call.1} parent=5 // pred_check
        %p210 = pneg %p209
      $region18: #{tpu_custom_call.1} parent=5 // pred_check_branch
        %212 = sbr.rel (%p210) target = $region20
      $region19: #{tpu_custom_call.1} parent=5 // pred_region
        // Predicated region
        $region21: #{tpu_custom_call.1} parent=19 // pred_check
          %p213 = pneg %p62
        $region22: #{tpu_custom_call.1} parent=19 // pred_check_branch
          %215 = sbr.rel (%p213) target = $region24
        $region23: #{tpu_custom_call.1} parent=19 // pred_region
          %s216 = sand.u32 %s52, 1
          %s217 = scalar_lea.sflag [#allocation4], %s216
          %s218 = sand.u32 %s52, 1
          %s219 = scalar_lea.vmem [#allocation3], %s218
          %s220 = smul.u32 %s28, 2
          %s221 = ssub.s32 %s220, 1
          %p222 = scmp.gt.s32.totalorder %s221, 0
          %s223 = scalar_select %p222, %s221, 0
          %s225 = ssub.s32 16, 16
          %226 = vsyncadd %s217, %s225
          %s227 = smul.addr %s27, 6
          %s228 = sadd.s32 %s223, %s227
          %s229 = smul.addr %s228, 16
          %s230 = scalar_lea.hbm %s0, %s229
          %s232 = sshll.u32 %s219, 4
          %s233 = int_to_ptr.vmem [resolvable:$true] %s232
          %235 = dma.hbm_to_vmem [thread:$0]  %s230, 16, %s233, %s217
        $region24: #{tpu_custom_call.1} parent=19 // pred_fallthru
          _
        // Predicated region
        $region25: #{tpu_custom_call.1} parent=19 // pred_check
          %p236 = pneg %p90
        $region26: #{tpu_custom_call.1} parent=19 // pred_check_branch
          %238 = sbr.rel (%p236) target = $region28
        $region27: #{tpu_custom_call.1} parent=19 // pred_region
          %s239 = sand.u32 %s20, 1
          %s240 = scalar_lea.sflag [#allocation7], %s239
          %s241 = sand.u32 %s80, 1
          %s242 = smul.addr %s241, 2
          %s243 = scalar_lea.vmem [#allocation6], %s242
          %s244 = smul.u32 2, %s28
          %s246 = ssub.s32 32, 32
          %247 = vsyncadd %s240, %s246
          %s248 = smul.addr %s27, 6
          %s249 = sadd.s32 %s244, %s248
          %s250 = smul.addr %s249, 16
          %s251 = scalar_lea.hbm %s1, %s250
          %s253 = sshll.u32 %s243, 4
          %s254 = int_to_ptr.vmem [resolvable:$true] %s253
          %256 = dma.hbm_to_vmem [thread:$0]  %s251, 32, %s254, %s240
        $region28: #{tpu_custom_call.1} parent=19 // pred_fallthru
          _
        // Predicated region
        $region29: #{tpu_custom_call.1} parent=19 // pred_check
          %p257 = pneg %p126
        $region30: #{tpu_custom_call.1} parent=19 // pred_check_branch
          %259 = sbr.rel (%p257) target = $region32
        $region31: #{tpu_custom_call.1} parent=19 // pred_region
          %s260 = sand.u32 %s20, 1
          %s261 = scalar_lea.sflag [#allocation7], %s260
          %s262 = sand.u32 %s116, 1
          %s263 = scalar_lea.vmem [#allocation8], %s262
          %s264 = sadd.s32 %s28, 1
          %s265 = smul.u32 %s264, 2
          %p266 = scmp.lt.s32.totalorder %s265, 5
          %s267 = scalar_select %p266, %s265, 5
          %s269 = ssub.s32 16, 16
          %270 = vsyncadd %s261, %s269
          %s271 = smul.addr %s27, 6
          %s272 = sadd.s32 %s267, %s271
          %s273 = smul.addr %s272, 16
          %s274 = scalar_lea.hbm %s2, %s273
          %s276 = sshll.u32 %s263, 4
          %s277 = int_to_ptr.vmem [resolvable:$true] %s276
          %279 = dma.hbm_to_vmem [thread:$0]  %s274, 16, %s277, %s261
        $region32: #{tpu_custom_call.1} parent=19 // pred_fallthru
          _
      $region20: #{tpu_custom_call.1} parent=5 // pred_fallthru
        _
      %p280 = scmp.le.s32.totalorder 1, %s20
      %p281 = scmp.lt.s32.totalorder %s20, 7
      %p282 = pnand %p280, %p281
      %p283 = pneg %p282
      // Predicated region
      $region33: #{tpu_custom_call.1} parent=5 // pred_check
        _
      $region34: #{tpu_custom_call.1} parent=5 // pred_check_branch
        %285 = sbr.rel (%p282) target = $region36
      $region35: #{tpu_custom_call.1} parent=5 // pred_region
        %s286 = ssub.s32 %s20, 1
        %s287 = sand.u32 %s55, 1
        %s288 = scalar_lea.sflag [#allocation4], %s287
        %s289 = sand.u32 %s55, 1
        %s290 = scalar_lea.vmem [#allocation3], %s289
        // Predicated region
        $region37: #{tpu_custom_call.1} parent=35 // pred_check
          %p291 = pneg %p68
        $region38: #{tpu_custom_call.1} parent=35 // pred_check_branch
          %293 = sbr.rel (%p291) target = $region40
        $region39: #{tpu_custom_call.1} parent=35 // pred_region
          %294 = dma.done %s288, 16
        $region40: #{tpu_custom_call.1} parent=35 // pred_fallthru
          _
        %s295 = sand.u32 %s25, 1
        %s296 = scalar_lea.sflag [#allocation7], %s295
        %s297 = sand.u32 %s83, 1
        %s298 = smul.addr %s297, 2
        %s299 = scalar_lea.vmem [#allocation6], %s298
        // Predicated region
        $region41: #{tpu_custom_call.1} parent=35 // pred_check
          %p300 = pneg %p96
        $region42: #{tpu_custom_call.1} parent=35 // pred_check_branch
          %302 = sbr.rel (%p300) target = $region44
        $region43: #{tpu_custom_call.1} parent=35 // pred_region
          %303 = dma.done %s296, 32
        $region44: #{tpu_custom_call.1} parent=35 // pred_fallthru
          _
        %s304 = sand.u32 %s25, 1
        %s305 = scalar_lea.sflag [#allocation7], %s304
        %s306 = sand.u32 %s119, 1
        %s307 = scalar_lea.vmem [#allocation8], %s306
        // Predicated region
        $region45: #{tpu_custom_call.1} parent=35 // pred_check
          %p308 = pneg %p132
        $region46: #{tpu_custom_call.1} parent=35 // pred_check_branch
          %310 = sbr.rel (%p308) target = $region48
        $region47: #{tpu_custom_call.1} parent=35 // pred_region
          %311 = dma.done %s305, 16
        $region48: #{tpu_custom_call.1} parent=35 // pred_fallthru
          _
        // Predicated region
        $region49: #{tpu_custom_call.1} parent=35 // pred_check
          %p312 = pneg %p153
        $region50: #{tpu_custom_call.1} parent=35 // pred_check_branch
          %314 = sbr.rel (%p312) target = $region52
        $region51: #{tpu_custom_call.1} parent=35 // pred_region
          %315 = dma.done [#allocation10], 896
        $region52: #{tpu_custom_call.1} parent=35 // pred_fallthru
          _
        %s316 = sand.u32 %s55, 1
        %s317 = scalar_lea.sflag [#allocation4], %s316
        %s318 = sand.u32 %s55, 1
        %s319 = scalar_lea.vmem [#allocation3], %s318
        %p320 = pneg %p68
        %p321 = pneg %p65
        %s322 = sand.u32 %s25, 1
        %s323 = scalar_lea.sflag [#allocation7], %s322
        %s324 = sand.u32 %s83, 1
        %s325 = smul.addr %s324, 2
        %s326 = scalar_lea.vmem [#allocation6], %s325
        %p327 = pneg %p96
        %p328 = pneg %p93
        %s329 = sand.u32 %s25, 1
        %s330 = scalar_lea.sflag [#allocation7], %s329
        %s331 = sand.u32 %s119, 1
        %s332 = scalar_lea.vmem [#allocation8], %s331
        %p333 = pneg %p132
        %p334 = pneg %p129
        %p335 = pneg %p153
        %p336 = pneg %p150
        %p337 = pneg %p181
        %p338 = pneg %p178
        %s339 = sand.u32 %s168, 1
        %s340 = scalar_lea.sflag [#allocation5], %s339
        %s341 = sand.u32 %s168, 1
        %s342 = smul.addr %s341, 2
        %s343 = scalar_lea.vmem [#allocation11], %s342
        %s344 = smul.u32 %s30, 2
        %s345 = ssub.s32 %s344, 1
        %p346 = scmp.gt.s32.totalorder %s345, 0
        %s347 = scalar_select %p346, %s345, 0
        %s348 = smul.u32 2, %s30
        %s349 = sadd.s32 %s30, 1
        %s350 = smul.u32 %s349, 2
        %p351 = scmp.lt.s32.totalorder %s350, 5
        %s352 = scalar_select %p351, %s350, 5
        %s353 = smul.u32 2, %s30
        %v355 = vld [vmem:[%s290] sm:$0x1]
        %v356 = vlaneseq
        %vm357 = vcmp.ge.s32.totalorder %v356, 0
        %vm358 = vcmp.lt.s32.totalorder %v356, 128
        %vm359 = vmand %vm357, %vm358
        %360 = vst.msk [vmem:[#allocation2] sm:$0x1] %vm359, %v355
        %v361 = vld [vmem:[%s299] sm:$0x3]
        %vm362 = vcmp.lt.s32.totalorder %v356, 256
        %vm363 = vmand %vm357, %vm362
        %364 = vst.msk [vmem:[#allocation2 + $0x1] sm:$0x3] %vm363, %v361
        %v365 = vld [vmem:[%s307] sm:$0x1]
        %366 = vst.msk [vmem:[#allocation2 + $0x3] sm:$0x1] %vm359, %v365
        %p367 = scmp.eq.s32.totalorder %s30, 0
        // Predicated region
        $region53: #{tpu_custom_call.1} parent=35 // pred_check
          %p368 = pneg %p367
        $region54: #{tpu_custom_call.1} parent=35 // pred_check_branch
          %370 = sbr.rel (%p368) target = $region56
        $region55: #{tpu_custom_call.1} parent=35 // pred_region
          %371 = vst.msk [vmem:[#allocation2] sm:$0x1] %vm359, 0.0
        $region56: #{tpu_custom_call.1} parent=35 // pred_fallthru
          _
        %p372 = scmp.eq.s32.totalorder %s30, 2
        // Predicated region
        $region57: #{tpu_custom_call.1} parent=35 // pred_check
          %p373 = pneg %p372
        $region58: #{tpu_custom_call.1} parent=35 // pred_check_branch
          %375 = sbr.rel (%p373) target = $region60
        $region59: #{tpu_custom_call.1} parent=35 // pred_region
          %376 = vst.msk [vmem:[#allocation2 + $0x3] sm:$0x1] %vm359, 0.0
        $region60: #{tpu_custom_call.1} parent=35 // pred_fallthru
          _
        %v377 = vlaneseq
        %v378 = vand.u32 %v377, 127
        %v379 = vadd.s32 %v378, 128
        %v380 = vadd.s32 %v378, 256
        %s381 = smul.u32 %s30, 256
        %v382 = vld [vmem:[#allocation9] sm:$0xff]
        %v383 = vld [vmem:[#allocation9 + $0x8] sm:$0xff]
        %v384 = vld [vmem:[#allocation2] sm:$0xf]
        %386 = vset.pattern.permute.xlu0 0
        %387 = vperm.xlu0 %386, %v382
        %v388 = vpop.permute.xlu0 %387
        %391 = vset.pattern.permute.xlu0 0
        %392 = vperm.xlu0 %391, %v383
        %v393 = vpop.permute.xlu0 %392
        %v396 = vlaneseq
        %v397 = vshrl.u32 %v396, 7
        %v398 = vsub.s32 0, %v397
        %v399 = vrot.slane %v384, %v398
        %v400 = vlaneseq
        %v401 = vshrl.u32 %v400, 7
        %v402 = vsub.s32 1, %v401
        %v403 = vrot.slane %v384, %v402
        %v404 = vlaneseq
        %v405 = vshrl.u32 %v404, 7
        %v406 = vsub.s32 2, %v405
        %v407 = vrot.slane %v384, %v406
        %v408 = vlaneseq
        %v409 = vshrl.u32 %v408, 7
        %v410 = vsub.s32 3, %v409
        %v411 = vrot.slane %v384, %v410
        %v416 = vmul.f32 %v388, %v399
        %v417 = vmul.f32 %v388, %v403
        %v418 = vmul.f32 %v388, %v407
        %v419 = vmul.f32 %v388, %v411
        %v420 = vmul.f32 %v393, %v399
        %v421 = vmul.f32 %v393, %v403
        %v422 = vmul.f32 %v393, %v407
        %v423 = vmul.f32 %v393, %v411
        %424 = vset.pattern.permute.xlu0 1
        %425 = vperm.xlu0 %424, %v382
        %v426 = vpop.permute.xlu0 %425
        %428 = vset.pattern.permute.xlu0 1
        %429 = vperm.xlu0 %428, %v383
        %v430 = vpop.permute.xlu0 %429
        %v432 = vmul.f32 %v426, %v399
        %v433 = vmul.f32 %v426, %v403
        %v434 = vmul.f32 %v426, %v407
        %v435 = vmul.f32 %v426, %v411
        %v436 = vmul.f32 %v430, %v399
        %v437 = vmul.f32 %v430, %v403
        %v438 = vmul.f32 %v430, %v407
        %v439 = vmul.f32 %v430, %v411
        %448 = vrot.lane.b32.xlu0 %v432, 127
        %v449 = vpop.permute.xlu0 %448
        %450 = vrot.lane.b32.xlu0 %v433, 127
        %v451 = vpop.permute.xlu0 %450
        %452 = vrot.lane.b32.xlu0 %v434, 127
        %v453 = vpop.permute.xlu0 %452
        %454 = vrot.lane.b32.xlu0 %v435, 127
        %v455 = vpop.permute.xlu0 %454
        %456 = vrot.lane.b32.xlu0 %v436, 127
        %v457 = vpop.permute.xlu0 %456
        %458 = vrot.lane.b32.xlu0 %v437, 127
        %v459 = vpop.permute.xlu0 %458
        %460 = vrot.lane.b32.xlu0 %v438, 127
        %v461 = vpop.permute.xlu0 %460
        %462 = vrot.lane.b32.xlu0 %v439, 127
        %v463 = vpop.permute.xlu0 %462
        %vm464 = vcmask 1039360
        %v465 = vsel %vm464, %v449, %v451
        %v466 = vsel %vm464, %v451, %v453
        %v467 = vsel %vm464, %v453, %v455
        %v468 = vsel %vm464, %v457, %v459
        %v469 = vsel %vm464, %v459, %v461
        %v470 = vsel %vm464, %v461, %v463
        %v479 = vadd.f32 %v416, %v465
        %v480 = vadd.f32 %v417, %v466
        %v481 = vadd.f32 %v418, %v467
        %v482 = vadd.f32 %v419, %v455
        %v483 = vadd.f32 %v420, %v468
        %v484 = vadd.f32 %v421, %v469
        %v485 = vadd.f32 %v422, %v470
        %v486 = vadd.f32 %v423, %v463
        %487 = vset.pattern.permute.xlu0 2
        %488 = vperm.xlu0 %487, %v382
        %v489 = vpop.permute.xlu0 %488
        %491 = vset.pattern.permute.xlu0 2
        %492 = vperm.xlu0 %491, %v383
        %v493 = vpop.permute.xlu0 %492
        %v495 = vmul.f32 %v489, %v399
        %v496 = vmul.f32 %v489, %v403
        %v497 = vmul.f32 %v489, %v407
        %v498 = vmul.f32 %v489, %v411
        %v499 = vmul.f32 %v493, %v399
        %v500 = vmul.f32 %v493, %v403
        %v501 = vmul.f32 %v493, %v407
        %v502 = vmul.f32 %v493, %v411
        %511 = vrot.lane.b32.xlu0 %v495, 126
        %v512 = vpop.permute.xlu0 %511
        %513 = vrot.lane.b32.xlu0 %v496, 126
        %v514 = vpop.permute.xlu0 %513
        %515 = vrot.lane.b32.xlu0 %v497, 126
        %v516 = vpop.permute.xlu0 %515
        %517 = vrot.lane.b32.xlu0 %v498, 126
        %v518 = vpop.permute.xlu0 %517
        %519 = vrot.lane.b32.xlu0 %v499, 126
        %v520 = vpop.permute.xlu0 %519
        %521 = vrot.lane.b32.xlu0 %v500, 126
        %v522 = vpop.permute.xlu0 %521
        %523 = vrot.lane.b32.xlu0 %v501, 126
        %v524 = vpop.permute.xlu0 %523
        %525 = vrot.lane.b32.xlu0 %v502, 126
        %v526 = vpop.permute.xlu0 %525
        %vm527 = vcmask 1031168
        %v528 = vsel %vm527, %v512, %v514
        %v529 = vsel %vm527, %v514, %v516
        %v530 = vsel %vm527, %v516, %v518
        %v531 = vsel %vm527, %v520, %v522
        %v532 = vsel %vm527, %v522, %v524
        %v533 = vsel %vm527, %v524, %v526
        %v542 = vadd.f32 %v479, %v528
        %v543 = vadd.f32 %v480, %v529
        %v544 = vadd.f32 %v481, %v530
        %v545 = vadd.f32 %v482, %v518
        %v546 = vadd.f32 %v483, %v531
        %v547 = vadd.f32 %v484, %v532
        %v548 = vadd.f32 %v485, %v533
        %v549 = vadd.f32 %v486, %v526
        %550 = vset.pattern.permute.xlu0 48
        %551 = vperm.xlu0 %550, %v382
        %v552 = vpop.permute.xlu0 %551
        %554 = vset.pattern.permute.xlu0 48
        %555 = vperm.xlu0 %554, %v383
        %v556 = vpop.permute.xlu0 %555
        %v558 = vadd.f32 %v542, %v552
        %v559 = vadd.f32 %v543, %v552
        %v560 = vadd.f32 %v544, %v552
        %v561 = vadd.f32 %v545, %v552
        %v562 = vadd.f32 %v546, %v556
        %v563 = vadd.f32 %v547, %v556
        %v564 = vadd.f32 %v548, %v556
        %v565 = vadd.f32 %v549, %v556
        %v566 = vmul.f32 %v558, 0.2
        %v567 = vmul.f32 %v559, 0.2
        %v568 = vmul.f32 %v560, 0.2
        %v569 = vmul.f32 %v561, 0.2
        %v570 = vmul.f32 %v562, 0.2
        %v571 = vmul.f32 %v563, 0.2
        %v572 = vmul.f32 %v564, 0.2
        %v573 = vmul.f32 %v565, 0.2
        %v574 = vmax.f32 %v558, %v566
        %v575 = vmax.f32 %v559, %v567
        %v576 = vmax.f32 %v560, %v568
        %v577 = vmax.f32 %v561, %v569
        %v578 = vmax.f32 %v562, %v570
        %v579 = vmax.f32 %v563, %v571
        %v580 = vmax.f32 %v564, %v572
        %v581 = vmax.f32 %v565, %v573
        %s582 = ssub.s32 %s381, 4
        %v583 = vstv %s582
        %v584 = vadd.s32 %v378, %v583
        %v585 = vadd.s32 %v379, %v583
        %v586 = vadd.s32 %v380, %v583
        %vm587 = vcmp.ge.s32.totalorder %v584, 0
        %vm588 = vcmp.ge.s32.totalorder %v585, 0
        %vm589 = vcmp.ge.s32.totalorder %v586, 0
        %vm590 = vcmp.lt.s32.totalorder %v584, 768
        %vm591 = vcmp.lt.s32.totalorder %v585, 768
        %vm592 = vcmp.lt.s32.totalorder %v586, 768
        %vm593 = vmand %vm587, %vm590
        %vm594 = vmand %vm588, %vm591
        %vm595 = vmand %vm589, %vm592
        %v596 = vsel %vm593, 1, 0
        %v597 = vsel %vm594, 1, 0
        %v598 = vsel %vm595, 1, 0
        %vm599 = vcmp.eq.s32.totalorder %v596, 1
        %vm600 = vcmp.eq.s32.totalorder %v597, 1
        %vm601 = vcmp.eq.s32.totalorder %v598, 1
        %610 = vrot.lane.b32.xlu0 %v574, 5
        %v611 = vpop.permute.xlu0 %610
        %612 = vrot.lane.b32.xlu0 %v575, 5
        %v613 = vpop.permute.xlu0 %612
        %614 = vrot.lane.b32.xlu0 %v576, 5
        %v615 = vpop.permute.xlu0 %614
        %616 = vrot.lane.b32.xlu0 %v577, 5
        %v617 = vpop.permute.xlu0 %616
        %618 = vrot.lane.b32.xlu0 %v578, 5
        %v619 = vpop.permute.xlu0 %618
        %620 = vrot.lane.b32.xlu0 %v579, 5
        %v621 = vpop.permute.xlu0 %620
        %622 = vrot.lane.b32.xlu0 %v580, 5
        %v623 = vpop.permute.xlu0 %622
        %624 = vrot.lane.b32.xlu0 %v581, 5
        %v625 = vpop.permute.xlu0 %624
        %vm626 = vcmask 39936
        %v627 = vsel %vm626, %v611, %v613
        %v628 = vsel %vm626, %v613, %v615
        %v629 = vsel %vm626, %v615, %v617
        %v630 = vsel %vm626, %v619, %v621
        %v631 = vsel %vm626, %v621, %v623
        %v632 = vsel %vm626, %v623, %v625
        %v639 = vsel %vm599, %v627, 0.0
        %v640 = vsel %vm600, %v628, 0.0
        %v641 = vsel %vm601, %v629, 0.0
        %v642 = vsel %vm599, %v630, 0.0
        %v643 = vsel %vm600, %v631, 0.0
        %v644 = vsel %vm601, %v632, 0.0
        %v645 = vld [vmem:[#allocation9 + $0x10] sm:$0xff]
        %v646 = vld [vmem:[#allocation9 + $0x18] sm:$0xff]
        %v647 = vpack.c.bf16 %v642, %v639
        %v648 = vpack.c.bf16 %v643, %v640
        %v649 = vpack.c.bf16 %v644, %v641
        %v650 = vpack.c.bf16 %v646, %v645
        %652 = vrot.lane.b32.xlu0 %v650, 112
        %v653 = vpop.permute.xlu0 %652
        %657 = vrot.lane.b32.xlu0 %v647, 127
        %v658 = vpop.permute.xlu0 %657
        %659 = vrot.lane.b32.xlu0 %v648, 127
        %v660 = vpop.permute.xlu0 %659
        %661 = vrot.lane.b32.xlu0 %v649, 127
        %v662 = vpop.permute.xlu0 %661
        %vm663 = vcmask 1039360
        %v664 = vsel %vm663, %v658, %v660
        %v665 = vsel %vm663, %v660, %v662
        %vm669 = vcmask 130048
        %v671 = vsel %vm669, %v653, 0
        %673 = vmatprep.subr.bf16.mxu0 %v665
        %674 = vmatpush1.bf16.msra.mxu0 %v664
        %675 = vmatprep.subr.bf16.mxu0 0
        %676 = vmatpush1.bf16.msra.mxu0 0
        %677 = vmatprep.subr.bf16.mxu0 0
        %678 = vmatpush1.bf16.msra.mxu0 0
        %679 = vmatprep.subr.bf16.mxu0 0
        %680 = vmatpush1.bf16.msra.mxu0 0
        %681 = vmatprep.subr.bf16.mxu0 0
        %682 = vmatpush1.bf16.msra.mxu0 0
        %683 = vmatprep.subr.bf16.mxu0 0
        %684 = vmatpush1.bf16.msra.mxu0 0
        %685 = vmatprep.subr.bf16.mxu0 0
        %686 = vmatpush1.bf16.msra.mxu0 0
        %687 = vmatprep.subr.bf16.mxu0 0
        %688 = vmatpush1.bf16.msra.mxu0 0
        %689 = vmatprep.subr.bf16.mxu0 0
        %690 = vmatpush1.bf16.msra.mxu0 0
        %691 = vmatprep.subr.bf16.mxu0 0
        %692 = vmatpush1.bf16.msra.mxu0 0
        %693 = vmatprep.subr.bf16.mxu0 0
        %694 = vmatpush1.bf16.msra.mxu0 0
        %695 = vmatprep.subr.bf16.mxu0 0
        %696 = vmatpush1.bf16.msra.mxu0 0
        %697 = vmatprep.subr.bf16.mxu0 0
        %698 = vmatpush1.bf16.msra.mxu0 0
        %699 = vmatprep.subr.bf16.mxu0 0
        %700 = vmatpush1.bf16.msra.mxu0 0
        %701 = vmatprep.subr.bf16.mxu0 0
        %702 = vmatpush1.bf16.msra.mxu0 0
        %703 = vmatprep.subr.bf16.mxu0 0
        %704 = vmatpush1.bf16.msra.mxu0 0
        %705 = vmatprep.mubr.bf16.mxu0 0
        %706 = vmatmul.mubr.bf16.gmra.mrb[0].mxu0 %v671
        %v707 = vpop.f32.mrb[0].mxu0
        %v708 = vadd.f32 0.0, %v707
        %v709 = vpop.f32.mrb[0].mxu0
        %v710 = vadd.f32 0.0, %v709
        %v711 = vpop.f32.mrb[0].mxu0
        %v712 = vadd.f32 0.0, %v711
        %v713 = vpop.f32.mrb[0].mxu0
        %v714 = vadd.f32 0.0, %v713
        %715 = vdwg.mxu0
        %716 = vmatprep.subr.bf16.mxu0 0
        %717 = vmatpush1.bf16.msra.mxu0 %v662
        %718 = vmatprep.subr.bf16.mxu0 0
        %719 = vmatpush1.bf16.msra.mxu0 0
        %720 = vmatprep.subr.bf16.mxu0 0
        %721 = vmatpush1.bf16.msra.mxu0 0
        %722 = vmatprep.subr.bf16.mxu0 0
        %723 = vmatpush1.bf16.msra.mxu0 0
        %724 = vmatprep.subr.bf16.mxu0 0
        %725 = vmatpush1.bf16.msra.mxu0 0
        %726 = vmatprep.subr.bf16.mxu0 0
        %727 = vmatpush1.bf16.msra.mxu0 0
        %728 = vmatprep.subr.bf16.mxu0 0
        %729 = vmatpush1.bf16.msra.mxu0 0
        %730 = vmatprep.subr.bf16.mxu0 0
        %731 = vmatpush1.bf16.msra.mxu0 0
        %732 = vmatprep.subr.bf16.mxu0 0
        %733 = vmatpush1.bf16.msra.mxu0 0
        %734 = vmatprep.subr.bf16.mxu0 0
        %735 = vmatpush1.bf16.msra.mxu0 0
        %736 = vmatprep.subr.bf16.mxu0 0
        %737 = vmatpush1.bf16.msra.mxu0 0
        %738 = vmatprep.subr.bf16.mxu0 0
        %739 = vmatpush1.bf16.msra.mxu0 0
        %740 = vmatprep.subr.bf16.mxu0 0
        %741 = vmatpush1.bf16.msra.mxu0 0
        %742 = vmatprep.subr.bf16.mxu0 0
        %743 = vmatpush1.bf16.msra.mxu0 0
        %744 = vmatprep.subr.bf16.mxu0 0
        %745 = vmatpush1.bf16.msra.mxu0 0
        %746 = vmatprep.subr.bf16.mxu0 0
        %747 = vmatpush1.bf16.msra.mxu0 0
        %748 = vmatprep.mubr.bf16.mxu0 0
        %749 = vmatmul.mubr.bf16.gmra.mrb[0].mxu0 %v671
        %v750 = vpop.f32.mrb[0].mxu0
        %v751 = vadd.f32 0.0, %v750
        %v752 = vpop.f32.mrb[0].mxu0
        %v753 = vpop.f32.mrb[0].mxu0
        %v754 = vadd.f32 0.0, %v753
        %v755 = vpop.f32.mrb[0].mxu0
        %756 = vdwg.mxu0
        %v758 = vsel %vm669, %v650, 0
        %760 = vmatprep.subr.bf16.mxu0 %v648
        %761 = vmatpush1.bf16.msra.mxu0 %v647
        %762 = vmatprep.subr.bf16.mxu0 0
        %763 = vmatpush1.bf16.msra.mxu0 0
        %764 = vmatprep.subr.bf16.mxu0 0
        %765 = vmatpush1.bf16.msra.mxu0 0
        %766 = vmatprep.subr.bf16.mxu0 0
        %767 = vmatpush1.bf16.msra.mxu0 0
        %768 = vmatprep.subr.bf16.mxu0 0
        %769 = vmatpush1.bf16.msra.mxu0 0
        %770 = vmatprep.subr.bf16.mxu0 0
        %771 = vmatpush1.bf16.msra.mxu0 0
        %772 = vmatprep.subr.bf16.mxu0 0
        %773 = vmatpush1.bf16.msra.mxu0 0
        %774 = vmatprep.subr.bf16.mxu0 0
        %775 = vmatpush1.bf16.msra.mxu0 0
        %776 = vmatprep.subr.bf16.mxu0 0
        %777 = vmatpush1.bf16.msra.mxu0 0
        %778 = vmatprep.subr.bf16.mxu0 0
        %779 = vmatpush1.bf16.msra.mxu0 0
        %780 = vmatprep.subr.bf16.mxu0 0
        %781 = vmatpush1.bf16.msra.mxu0 0
        %782 = vmatprep.subr.bf16.mxu0 0
        %783 = vmatpush1.bf16.msra.mxu0 0
        %784 = vmatprep.subr.bf16.mxu0 0
        %785 = vmatpush1.bf16.msra.mxu0 0
        %786 = vmatprep.subr.bf16.mxu0 0
        %787 = vmatpush1.bf16.msra.mxu0 0
        %788 = vmatprep.subr.bf16.mxu0 0
        %789 = vmatpush1.bf16.msra.mxu0 0
        %790 = vmatprep.subr.bf16.mxu0 0
        %791 = vmatpush1.bf16.msra.mxu0 0
        %792 = vmatprep.mubr.bf16.mxu0 0
        %793 = vmatmul.mubr.bf16.gmra.mrb[0].mxu0 %v758
        %v794 = vpop.f32.mrb[0].mxu0
        %v795 = vadd.f32 %v708, %v794
        %v796 = vpop.f32.mrb[0].mxu0
        %v797 = vadd.f32 %v710, %v796
        %v798 = vpop.f32.mrb[0].mxu0
        %v799 = vadd.f32 %v712, %v798
        %v800 = vpop.f32.mrb[0].mxu0
        %v801 = vadd.f32 %v714, %v800
        %802 = vdwg.mxu0
        %803 = vmatprep.subr.bf16.mxu0 0
        %804 = vmatpush1.bf16.msra.mxu0 %v649
        %805 = vmatprep.subr.bf16.mxu0 0
        %806 = vmatpush1.bf16.msra.mxu0 0
        %807 = vmatprep.subr.bf16.mxu0 0
        %808 = vmatpush1.bf16.msra.mxu0 0
        %809 = vmatprep.subr.bf16.mxu0 0
        %810 = vmatpush1.bf16.msra.mxu0 0
        %811 = vmatprep.subr.bf16.mxu0 0
        %812 = vmatpush1.bf16.msra.mxu0 0
        %813 = vmatprep.subr.bf16.mxu0 0
        %814 = vmatpush1.bf16.msra.mxu0 0
        %815 = vmatprep.subr.bf16.mxu0 0
        %816 = vmatpush1.bf16.msra.mxu0 0
        %817 = vmatprep.subr.bf16.mxu0 0
        %818 = vmatpush1.bf16.msra.mxu0 0
        %819 = vmatprep.subr.bf16.mxu0 0
        %820 = vmatpush1.bf16.msra.mxu0 0
        %821 = vmatprep.subr.bf16.mxu0 0
        %822 = vmatpush1.bf16.msra.mxu0 0
        %823 = vmatprep.subr.bf16.mxu0 0
        %824 = vmatpush1.bf16.msra.mxu0 0
        %825 = vmatprep.subr.bf16.mxu0 0
        %826 = vmatpush1.bf16.msra.mxu0 0
        %827 = vmatprep.subr.bf16.mxu0 0
        %828 = vmatpush1.bf16.msra.mxu0 0
        %829 = vmatprep.subr.bf16.mxu0 0
        %830 = vmatpush1.bf16.msra.mxu0 0
        %831 = vmatprep.subr.bf16.mxu0 0
        %832 = vmatpush1.bf16.msra.mxu0 0
        %833 = vmatprep.subr.bf16.mxu0 0
        %834 = vmatpush1.bf16.msra.mxu0 0
        %835 = vmatprep.mubr.bf16.mxu0 0
        %836 = vmatmul.mubr.bf16.gmra.mrb[0].mxu0 %v758
        %v837 = vpop.f32.mrb[0].mxu0
        %v838 = vadd.f32 %v751, %v837
        %v839 = vpop.f32.mrb[0].mxu0
        %v840 = vpop.f32.mrb[0].mxu0
        %v841 = vadd.f32 %v754, %v840
        %v842 = vpop.f32.mrb[0].mxu0
        %843 = vdwg.mxu0
        %844 = vrot.lane.b32.xlu0 %v650, 96
        %v845 = vpop.permute.xlu0 %844
        %846 = vrot.lane.b32.xlu0 %v647, 126
        %v847 = vpop.permute.xlu0 %846
        %848 = vrot.lane.b32.xlu0 %v648, 126
        %v849 = vpop.permute.xlu0 %848
        %850 = vrot.lane.b32.xlu0 %v649, 126
        %v851 = vpop.permute.xlu0 %850
        %vm852 = vcmask 1031168
        %v853 = vsel %vm852, %v847, %v849
        %v854 = vsel %vm852, %v849, %v851
        %v859 = vsel %vm669, %v845, 0
        %861 = vmatprep.subr.bf16.mxu0 %v854
        %862 = vmatpush1.bf16.msra.mxu0 %v853
        %863 = vmatprep.subr.bf16.mxu0 0
        %864 = vmatpush1.bf16.msra.mxu0 0
        %865 = vmatprep.subr.bf16.mxu0 0
        %866 = vmatpush1.bf16.msra.mxu0 0
        %867 = vmatprep.subr.bf16.mxu0 0
        %868 = vmatpush1.bf16.msra.mxu0 0
        %869 = vmatprep.subr.bf16.mxu0 0
        %870 = vmatpush1.bf16.msra.mxu0 0
        %871 = vmatprep.subr.bf16.mxu0 0
        %872 = vmatpush1.bf16.msra.mxu0 0
        %873 = vmatprep.subr.bf16.mxu0 0
        %874 = vmatpush1.bf16.msra.mxu0 0
        %875 = vmatprep.subr.bf16.mxu0 0
        %876 = vmatpush1.bf16.msra.mxu0 0
        %877 = vmatprep.subr.bf16.mxu0 0
        %878 = vmatpush1.bf16.msra.mxu0 0
        %879 = vmatprep.subr.bf16.mxu0 0
        %880 = vmatpush1.bf16.msra.mxu0 0
        %881 = vmatprep.subr.bf16.mxu0 0
        %882 = vmatpush1.bf16.msra.mxu0 0
        %883 = vmatprep.subr.bf16.mxu0 0
        %884 = vmatpush1.bf16.msra.mxu0 0
        %885 = vmatprep.subr.bf16.mxu0 0
        %886 = vmatpush1.bf16.msra.mxu0 0
        %887 = vmatprep.subr.bf16.mxu0 0
        %888 = vmatpush1.bf16.msra.mxu0 0
        %889 = vmatprep.subr.bf16.mxu0 0
        %890 = vmatpush1.bf16.msra.mxu0 0
        %891 = vmatprep.subr.bf16.mxu0 0
        %892 = vmatpush1.bf16.msra.mxu0 0
        %893 = vmatprep.mubr.bf16.mxu0 0
        %894 = vmatmul.mubr.bf16.gmra.mrb[0].mxu0 %v859
        %v895 = vpop.f32.mrb[0].mxu0
        %v896 = vadd.f32 0.0, %v895
        %v897 = vpop.f32.mrb[0].mxu0
        %v898 = vadd.f32 0.0, %v897
        %v899 = vpop.f32.mrb[0].mxu0
        %v900 = vadd.f32 0.0, %v899
        %v901 = vpop.f32.mrb[0].mxu0
        %v902 = vadd.f32 0.0, %v901
        %903 = vdwg.mxu0
        %904 = vmatprep.subr.bf16.mxu0 0
        %905 = vmatpush1.bf16.msra.mxu0 %v851
        %906 = vmatprep.subr.bf16.mxu0 0
        %907 = vmatpush1.bf16.msra.mxu0 0
        %908 = vmatprep.subr.bf16.mxu0 0
        %909 = vmatpush1.bf16.msra.mxu0 0
        %910 = vmatprep.subr.bf16.mxu0 0
        %911 = vmatpush1.bf16.msra.mxu0 0
        %912 = vmatprep.subr.bf16.mxu0 0
        %913 = vmatpush1.bf16.msra.mxu0 0
        %914 = vmatprep.subr.bf16.mxu0 0
        %915 = vmatpush1.bf16.msra.mxu0 0
        %916 = vmatprep.subr.bf16.mxu0 0
        %917 = vmatpush1.bf16.msra.mxu0 0
        %918 = vmatprep.subr.bf16.mxu0 0
        %919 = vmatpush1.bf16.msra.mxu0 0
        %920 = vmatprep.subr.bf16.mxu0 0
        %921 = vmatpush1.bf16.msra.mxu0 0
        %922 = vmatprep.subr.bf16.mxu0 0
        %923 = vmatpush1.bf16.msra.mxu0 0
        %924 = vmatprep.subr.bf16.mxu0 0
        %925 = vmatpush1.bf16.msra.mxu0 0
        %926 = vmatprep.subr.bf16.mxu0 0
        %927 = vmatpush1.bf16.msra.mxu0 0
        %928 = vmatprep.subr.bf16.mxu0 0
        %929 = vmatpush1.bf16.msra.mxu0 0
        %930 = vmatprep.subr.bf16.mxu0 0
        %931 = vmatpush1.bf16.msra.mxu0 0
        %932 = vmatprep.subr.bf16.mxu0 0
        %933 = vmatpush1.bf16.msra.mxu0 0
        %934 = vmatprep.subr.bf16.mxu0 0
        %935 = vmatpush1.bf16.msra.mxu0 0
        %936 = vmatprep.mubr.bf16.mxu0 0
        %937 = vmatmul.mubr.bf16.gmra.mrb[0].mxu0 %v859
        %v938 = vpop.f32.mrb[0].mxu0
        %v939 = vadd.f32 0.0, %v938
        %v940 = vpop.f32.mrb[0].mxu0
        %v941 = vpop.f32.mrb[0].mxu0
        %v942 = vadd.f32 0.0, %v941
        %v943 = vpop.f32.mrb[0].mxu0
        %944 = vdwg.mxu0
        %v945 = vadd.f32 %v795, %v896
        %v946 = vadd.f32 %v797, %v898
        %v947 = vadd.f32 %v838, %v939
        %v948 = vadd.f32 %v799, %v900
        %v949 = vadd.f32 %v801, %v902
        %v950 = vadd.f32 %v841, %v942
        %952 = vset.pattern.permute.xlu0 48
        %953 = vperm.xlu0 %952, %v645
        %v954 = vpop.permute.xlu0 %953
        %957 = vset.pattern.permute.xlu0 48
        %958 = vperm.xlu0 %957, %v646
        %v959 = vpop.permute.xlu0 %958
        %v961 = vadd.f32 %v945, %v954
        %v962 = vadd.f32 %v946, %v954
        %v963 = vadd.f32 %v947, %v954
        %v964 = vadd.f32 %v948, %v959
        %v965 = vadd.f32 %v949, %v959
        %v966 = vadd.f32 %v950, %v959
        %v967 = vmul.f32 %v961, 0.2
        %v968 = vmul.f32 %v962, 0.2
        %v969 = vmul.f32 %v963, 0.2
        %v970 = vmul.f32 %v964, 0.2
        %v971 = vmul.f32 %v965, 0.2
        %v972 = vmul.f32 %v966, 0.2
        %v973 = vmax.f32 %v961, %v967
        %v974 = vmax.f32 %v962, %v968
        %v975 = vmax.f32 %v963, %v969
        %v976 = vmax.f32 %v964, %v970
        %v977 = vmax.f32 %v965, %v971
        %v978 = vmax.f32 %v966, %v972
        %s979 = ssub.s32 %s381, 3
        %v980 = vstv %s979
        %v981 = vadd.s32 %v378, %v980
        %v982 = vadd.s32 %v379, %v980
        %v983 = vadd.s32 %v380, %v980
        %vm984 = vcmp.ge.s32.totalorder %v981, 0
        %vm985 = vcmp.ge.s32.totalorder %v982, 0
        %vm986 = vcmp.ge.s32.totalorder %v983, 0
        %vm987 = vcmp.lt.s32.totalorder %v981, 768
        %vm988 = vcmp.lt.s32.totalorder %v982, 768
        %vm989 = vcmp.lt.s32.totalorder %v983, 768
        %vm990 = vmand %vm984, %vm987
        %vm991 = vmand %vm985, %vm988
        %vm992 = vmand %vm986, %vm989
        %v993 = vsel %vm990, 1, 0
        %v994 = vsel %vm991, 1, 0
        %v995 = vsel %vm992, 1, 0
        %vm996 = vcmp.eq.s32.totalorder %v993, 1
        %vm997 = vcmp.eq.s32.totalorder %v994, 1
        %vm998 = vcmp.eq.s32.totalorder %v995, 1
        %v999 = vsel %vm996, %v973, 0.0
        %v1000 = vsel %vm997, %v974, 0.0
        %v1001 = vsel %vm998, %v975, 0.0
        %v1002 = vsel %vm996, %v976, 0.0
        %v1003 = vsel %vm997, %v977, 0.0
        %v1004 = vsel %vm998, %v978, 0.0
        %v1005 = vld [vmem:[#allocation9 + $0x20] sm:$0xff]
        %v1006 = vld [vmem:[#allocation9 + $0x28] sm:$0xff]
        %v1007 = vpack.c.bf16 %v1002, %v999
        %v1008 = vpack.c.bf16 %v1003, %v1000
        %v1009 = vpack.c.bf16 %v1004, %v1001
        %v1010 = vpack.c.bf16 %v1006, %v1005
        %1012 = vrot.lane.b32.xlu0 %v1010, 112
        %v1013 = vpop.permute.xlu0 %1012
        %1017 = vrot.lane.b32.xlu0 %v1007, 126
        %v1018 = vpop.permute.xlu0 %1017
        %1019 = vrot.lane.b32.xlu0 %v1008, 126
        %v1020 = vpop.permute.xlu0 %1019
        %1021 = vrot.lane.b32.xlu0 %v1009, 126
        %v1022 = vpop.permute.xlu0 %1021
        %v1023 = vsel %vm852, %v1018, %v1020
        %v1024 = vsel %vm852, %v1020, %v1022
        %v1029 = vsel %vm669, %v1013, 0
        %1031 = vmatprep.subr.bf16.mxu0 %v1024
        %1032 = vmatpush1.bf16.msra.mxu0 %v1023
        %1033 = vmatprep.subr.bf16.mxu0 0
        %1034 = vmatpush1.bf16.msra.mxu0 0
        %1035 = vmatprep.subr.bf16.mxu0 0
        %1036 = vmatpush1.bf16.msra.mxu0 0
        %1037 = vmatprep.subr.bf16.mxu0 0
        %1038 = vmatpush1.bf16.msra.mxu0 0
        %1039 = vmatprep.subr.bf16.mxu0 0
        %1040 = vmatpush1.bf16.msra.mxu0 0
        %1041 = vmatprep.subr.bf16.mxu0 0
        %1042 = vmatpush1.bf16.msra.mxu0 0
        %1043 = vmatprep.subr.bf16.mxu0 0
        %1044 = vmatpush1.bf16.msra.mxu0 0
        %1045 = vmatprep.subr.bf16.mxu0 0
        %1046 = vmatpush1.bf16.msra.mxu0 0
        %1047 = vmatprep.subr.bf16.mxu0 0
        %1048 = vmatpush1.bf16.msra.mxu0 0
        %1049 = vmatprep.subr.bf16.mxu0 0
        %1050 = vmatpush1.bf16.msra.mxu0 0
        %1051 = vmatprep.subr.bf16.mxu0 0
        %1052 = vmatpush1.bf16.msra.mxu0 0
        %1053 = vmatprep.subr.bf16.mxu0 0
        %1054 = vmatpush1.bf16.msra.mxu0 0
        %1055 = vmatprep.subr.bf16.mxu0 0
        %1056 = vmatpush1.bf16.msra.mxu0 0
        %1057 = vmatprep.subr.bf16.mxu0 0
        %1058 = vmatpush1.bf16.msra.mxu0 0
        %1059 = vmatprep.subr.bf16.mxu0 0
        %1060 = vmatpush1.bf16.msra.mxu0 0
        %1061 = vmatprep.subr.bf16.mxu0 0
        %1062 = vmatpush1.bf16.msra.mxu0 0
        %1063 = vmatprep.mubr.bf16.mxu0 0
        %1064 = vmatmul.mubr.bf16.gmra.mrb[0].mxu0 %v1029
        %v1065 = vpop.f32.mrb[0].mxu0
        %v1066 = vadd.f32 0.0, %v1065
        %v1067 = vpop.f32.mrb[0].mxu0
        %v1068 = vadd.f32 0.0, %v1067
        %v1069 = vpop.f32.mrb[0].mxu0
        %v1070 = vadd.f32 0.0, %v1069
        %v1071 = vpop.f32.mrb[0].mxu0
        %v1072 = vadd.f32 0.0, %v1071
        %1073 = vdwg.mxu0
        %1074 = vmatprep.subr.bf16.mxu0 0
        %1075 = vmatpush1.bf16.msra.mxu0 %v1022
        %1076 = vmatprep.subr.bf16.mxu0 0
        %1077 = vmatpush1.bf16.msra.mxu0 0
        %1078 = vmatprep.subr.bf16.mxu0 0
        %1079 = vmatpush1.bf16.msra.mxu0 0
        %1080 = vmatprep.subr.bf16.mxu0 0
        %1081 = vmatpush1.bf16.msra.mxu0 0
        %1082 = vmatprep.subr.bf16.mxu0 0
        %1083 = vmatpush1.bf16.msra.mxu0 0
        %1084 = vmatprep.subr.bf16.mxu0 0
        %1085 = vmatpush1.bf16.msra.mxu0 0
        %1086 = vmatprep.subr.bf16.mxu0 0
        %1087 = vmatpush1.bf16.msra.mxu0 0
        %1088 = vmatprep.subr.bf16.mxu0 0
        %1089 = vmatpush1.bf16.msra.mxu0 0
        %1090 = vmatprep.subr.bf16.mxu0 0
        %1091 = vmatpush1.bf16.msra.mxu0 0
        %1092 = vmatprep.subr.bf16.mxu0 0
        %1093 = vmatpush1.bf16.msra.mxu0 0
        %1094 = vmatprep.subr.bf16.mxu0 0
        %1095 = vmatpush1.bf16.msra.mxu0 0
        %1096 = vmatprep.subr.bf16.mxu0 0
        %1097 = vmatpush1.bf16.msra.mxu0 0
        %1098 = vmatprep.subr.bf16.mxu0 0
        %1099 = vmatpush1.bf16.msra.mxu0 0
        %1100 = vmatprep.subr.bf16.mxu0 0
        %1101 = vmatpush1.bf16.msra.mxu0 0
        %1102 = vmatprep.subr.bf16.mxu0 0
        %1103 = vmatpush1.bf16.msra.mxu0 0
        %1104 = vmatprep.subr.bf16.mxu0 0
        %1105 = vmatpush1.bf16.msra.mxu0 0
        %1106 = vmatprep.mubr.bf16.mxu0 0
        %1107 = vmatmul.mubr.bf16.gmra.mrb[0].mxu0 %v1029
        %v1108 = vpop.f32.mrb[0].mxu0
        %v1109 = vadd.f32 0.0, %v1108
        %v1110 = vpop.f32.mrb[0].mxu0
        %v1111 = vpop.f32.mrb[0].mxu0
        %v1112 = vadd.f32 0.0, %v1111
        %v1113 = vpop.f32.mrb[0].mxu0
        %1114 = vdwg.mxu0
        %v1116 = vsel %vm669, %v1010, 0
        %1118 = vmatprep.subr.bf16.mxu0 %v1008
        %1119 = vmatpush1.bf16.msra.mxu0 %v1007
        %1120 = vmatprep.subr.bf16.mxu0 0
        %1121 = vmatpush1.bf16.msra.mxu0 0
        %1122 = vmatprep.subr.bf16.mxu0 0
        %1123 = vmatpush1.bf16.msra.mxu0 0
        %1124 = vmatprep.subr.bf16.mxu0 0
        %1125 = vmatpush1.bf16.msra.mxu0 0
        %1126 = vmatprep.subr.bf16.mxu0 0
        %1127 = vmatpush1.bf16.msra.mxu0 0
        %1128 = vmatprep.subr.bf16.mxu0 0
        %1129 = vmatpush1.bf16.msra.mxu0 0
        %1130 = vmatprep.subr.bf16.mxu0 0
        %1131 = vmatpush1.bf16.msra.mxu0 0
        %1132 = vmatprep.subr.bf16.mxu0 0
        %1133 = vmatpush1.bf16.msra.mxu0 0
        %1134 = vmatprep.subr.bf16.mxu0 0
        %1135 = vmatpush1.bf16.msra.mxu0 0
        %1136 = vmatprep.subr.bf16.mxu0 0
        %1137 = vmatpush1.bf16.msra.mxu0 0
        %1138 = vmatprep.subr.bf16.mxu0 0
        %1139 = vmatpush1.bf16.msra.mxu0 0
        %1140 = vmatprep.subr.bf16.mxu0 0
        %1141 = vmatpush1.bf16.msra.mxu0 0
        %1142 = vmatprep.subr.bf16.mxu0 0
        %1143 = vmatpush1.bf16.msra.mxu0 0
        %1144 = vmatprep.subr.bf16.mxu0 0
        %1145 = vmatpush1.bf16.msra.mxu0 0
        %1146 = vmatprep.subr.bf16.mxu0 0
        %1147 = vmatpush1.bf16.msra.mxu0 0
        %1148 = vmatprep.subr.bf16.mxu0 0
        %1149 = vmatpush1.bf16.msra.mxu0 0
        %1150 = vmatprep.mubr.bf16.mxu0 0
        %1151 = vmatmul.mubr.bf16.gmra.mrb[0].mxu0 %v1116
        %v1152 = vpop.f32.mrb[0].mxu0
        %v1153 = vadd.f32 %v1066, %v1152
        %v1154 = vpop.f32.mrb[0].mxu0
        %v1155 = vadd.f32 %v1068, %v1154
        %v1156 = vpop.f32.mrb[0].mxu0
        %v1157 = vadd.f32 %v1070, %v1156
        %v1158 = vpop.f32.mrb[0].mxu0
        %v1159 = vadd.f32 %v1072, %v1158
        %1160 = vdwg.mxu0
        %1161 = vmatprep.subr.bf16.mxu0 0
        %1162 = vmatpush1.bf16.msra.mxu0 %v1009
        %1163 = vmatprep.subr.bf16.mxu0 0
        %1164 = vmatpush1.bf16.msra.mxu0 0
        %1165 = vmatprep.subr.bf16.mxu0 0
        %1166 = vmatpush1.bf16.msra.mxu0 0
        %1167 = vmatprep.subr.bf16.mxu0 0
        %1168 = vmatpush1.bf16.msra.mxu0 0
        %1169 = vmatprep.subr.bf16.mxu0 0
        %1170 = vmatpush1.bf16.msra.mxu0 0
        %1171 = vmatprep.subr.bf16.mxu0 0
        %1172 = vmatpush1.bf16.msra.mxu0 0
        %1173 = vmatprep.subr.bf16.mxu0 0
        %1174 = vmatpush1.bf16.msra.mxu0 0
        %1175 = vmatprep.subr.bf16.mxu0 0
        %1176 = vmatpush1.bf16.msra.mxu0 0
        %1177 = vmatprep.subr.bf16.mxu0 0
        %1178 = vmatpush1.bf16.msra.mxu0 0
        %1179 = vmatprep.subr.bf16.mxu0 0
        %1180 = vmatpush1.bf16.msra.mxu0 0
        %1181 = vmatprep.subr.bf16.mxu0 0
        %1182 = vmatpush1.bf16.msra.mxu0 0
        %1183 = vmatprep.subr.bf16.mxu0 0
        %1184 = vmatpush1.bf16.msra.mxu0 0
        %1185 = vmatprep.subr.bf16.mxu0 0
        %1186 = vmatpush1.bf16.msra.mxu0 0
        %1187 = vmatprep.subr.bf16.mxu0 0
        %1188 = vmatpush1.bf16.msra.mxu0 0
        %1189 = vmatprep.subr.bf16.mxu0 0
        %1190 = vmatpush1.bf16.msra.mxu0 0
        %1191 = vmatprep.subr.bf16.mxu0 0
        %1192 = vmatpush1.bf16.msra.mxu0 0
        %1193 = vmatprep.mubr.bf16.mxu0 0
        %1194 = vmatmul.mubr.bf16.gmra.mrb[0].mxu0 %v1116
        %v1195 = vpop.f32.mrb[0].mxu0
        %v1196 = vadd.f32 %v1109, %v1195
        %v1197 = vpop.f32.mrb[0].mxu0
        %v1198 = vpop.f32.mrb[0].mxu0
        %v1199 = vadd.f32 %v1112, %v1198
        %v1200 = vpop.f32.mrb[0].mxu0
        %1201 = vdwg.mxu0
        %1202 = vrot.lane.b32.xlu0 %v1010, 96
        %v1203 = vpop.permute.xlu0 %1202
        %1204 = vrot.lane.b32.xlu0 %v1007, 124
        %v1205 = vpop.permute.xlu0 %1204
        %1206 = vrot.lane.b32.xlu0 %v1008, 124
        %v1207 = vpop.permute.xlu0 %1206
        %1208 = vrot.lane.b32.xlu0 %v1009, 124
        %v1209 = vpop.permute.xlu0 %1208
        %vm1210 = vcmask 1014784
        %v1211 = vsel %vm1210, %v1205, %v1207
        %v1212 = vsel %vm1210, %v1207, %v1209
        %v1217 = vsel %vm669, %v1203, 0
        %1219 = vmatprep.subr.bf16.mxu0 %v1212
        %1220 = vmatpush1.bf16.msra.mxu0 %v1211
        %1221 = vmatprep.subr.bf16.mxu0 0
        %1222 = vmatpush1.bf16.msra.mxu0 0
        %1223 = vmatprep.subr.bf16.mxu0 0
        %1224 = vmatpush1.bf16.msra.mxu0 0
        %1225 = vmatprep.subr.bf16.mxu0 0
        %1226 = vmatpush1.bf16.msra.mxu0 0
        %1227 = vmatprep.subr.bf16.mxu0 0
        %1228 = vmatpush1.bf16.msra.mxu0 0
        %1229 = vmatprep.subr.bf16.mxu0 0
        %1230 = vmatpush1.bf16.msra.mxu0 0
        %1231 = vmatprep.subr.bf16.mxu0 0
        %1232 = vmatpush1.bf16.msra.mxu0 0
        %1233 = vmatprep.subr.bf16.mxu0 0
        %1234 = vmatpush1.bf16.msra.mxu0 0
        %1235 = vmatprep.subr.bf16.mxu0 0
        %1236 = vmatpush1.bf16.msra.mxu0 0
        %1237 = vmatprep.subr.bf16.mxu0 0
        %1238 = vmatpush1.bf16.msra.mxu0 0
        %1239 = vmatprep.subr.bf16.mxu0 0
        %1240 = vmatpush1.bf16.msra.mxu0 0
        %1241 = vmatprep.subr.bf16.mxu0 0
        %1242 = vmatpush1.bf16.msra.mxu0 0
        %1243 = vmatprep.subr.bf16.mxu0 0
        %1244 = vmatpush1.bf16.msra.mxu0 0
        %1245 = vmatprep.subr.bf16.mxu0 0
        %1246 = vmatpush1.bf16.msra.mxu0 0
        %1247 = vmatprep.subr.bf16.mxu0 0
        %1248 = vmatpush1.bf16.msra.mxu0 0
        %1249 = vmatprep.subr.bf16.mxu0 0
        %1250 = vmatpush1.bf16.msra.mxu0 0
        %1251 = vmatprep.mubr.bf16.mxu0 0
        %1252 = vmatmul.mubr.bf16.gmra.mrb[0].mxu0 %v1217
        %v1253 = vpop.f32.mrb[0].mxu0
        %v1254 = vadd.f32 0.0, %v1253
        %v1255 = vpop.f32.mrb[0].mxu0
        %v1256 = vadd.f32 0.0, %v1255
        %v1257 = vpop.f32.mrb[0].mxu0
        %v1258 = vadd.f32 0.0, %v1257
        %v1259 = vpop.f32.mrb[0].mxu0
        %v1260 = vadd.f32 0.0, %v1259
        %1261 = vdwg.mxu0
        %1262 = vmatprep.subr.bf16.mxu0 0
        %1263 = vmatpush1.bf16.msra.mxu0 %v1209
        %1264 = vmatprep.subr.bf16.mxu0 0
        %1265 = vmatpush1.bf16.msra.mxu0 0
        %1266 = vmatprep.subr.bf16.mxu0 0
        %1267 = vmatpush1.bf16.msra.mxu0 0
        %1268 = vmatprep.subr.bf16.mxu0 0
        %1269 = vmatpush1.bf16.msra.mxu0 0
        %1270 = vmatprep.subr.bf16.mxu0 0
        %1271 = vmatpush1.bf16.msra.mxu0 0
        %1272 = vmatprep.subr.bf16.mxu0 0
        %1273 = vmatpush1.bf16.msra.mxu0 0
        %1274 = vmatprep.subr.bf16.mxu0 0
        %1275 = vmatpush1.bf16.msra.mxu0 0
        %1276 = vmatprep.subr.bf16.mxu0 0
        %1277 = vmatpush1.bf16.msra.mxu0 0
        %1278 = vmatprep.subr.bf16.mxu0 0
        %1279 = vmatpush1.bf16.msra.mxu0 0
        %1280 = vmatprep.subr.bf16.mxu0 0
        %1281 = vmatpush1.bf16.msra.mxu0 0
        %1282 = vmatprep.subr.bf16.mxu0 0
        %1283 = vmatpush1.bf16.msra.mxu0 0
        %1284 = vmatprep.subr.bf16.mxu0 0
        %1285 = vmatpush1.bf16.msra.mxu0 0
        %1286 = vmatprep.subr.bf16.mxu0 0
        %1287 = vmatpush1.bf16.msra.mxu0 0
        %1288 = vmatprep.subr.bf16.mxu0 0
        %1289 = vmatpush1.bf16.msra.mxu0 0
        %1290 = vmatprep.subr.bf16.mxu0 0
        %1291 = vmatpush1.bf16.msra.mxu0 0
        %1292 = vmatprep.subr.bf16.mxu0 0
        %1293 = vmatpush1.bf16.msra.mxu0 0
        %1294 = vmatprep.mubr.bf16.mxu0 0
        %1295 = vmatmul.mubr.bf16.gmra.mrb[0].mxu0 %v1217
        %v1296 = vpop.f32.mrb[0].mxu0
        %v1297 = vadd.f32 0.0, %v1296
        %v1298 = vpop.f32.mrb[0].mxu0
        %v1299 = vpop.f32.mrb[0].mxu0
        %v1300 = vadd.f32 0.0, %v1299
        %v1301 = vpop.f32.mrb[0].mxu0
        %1302 = vdwg.mxu0
        %v1303 = vadd.f32 %v1153, %v1254
        %v1304 = vadd.f32 %v1155, %v1256
        %v1305 = vadd.f32 %v1196, %v1297
        %v1306 = vadd.f32 %v1157, %v1258
        %v1307 = vadd.f32 %v1159, %v1260
        %v1308 = vadd.f32 %v1199, %v1300
        %1310 = vset.pattern.permute.xlu0 48
        %1311 = vperm.xlu0 %1310, %v1005
        %v1312 = vpop.permute.xlu0 %1311
        %1315 = vset.pattern.permute.xlu0 48
        %1316 = vperm.xlu0 %1315, %v1006
        %v1317 = vpop.permute.xlu0 %1316
        %v1319 = vadd.f32 %v1303, %v1312
        %v1320 = vadd.f32 %v1304, %v1312
        %v1321 = vadd.f32 %v1305, %v1312
        %v1322 = vadd.f32 %v1306, %v1317
        %v1323 = vadd.f32 %v1307, %v1317
        %v1324 = vadd.f32 %v1308, %v1317
        %v1325 = vmul.f32 %v1319, 0.2
        %v1326 = vmul.f32 %v1320, 0.2
        %v1327 = vmul.f32 %v1321, 0.2
        %v1328 = vmul.f32 %v1322, 0.2
        %v1329 = vmul.f32 %v1323, 0.2
        %v1330 = vmul.f32 %v1324, 0.2
        %v1331 = vmax.f32 %v1319, %v1325
        %v1332 = vmax.f32 %v1320, %v1326
        %v1333 = vmax.f32 %v1321, %v1327
        %v1334 = vmax.f32 %v1322, %v1328
        %v1335 = vmax.f32 %v1323, %v1329
        %v1336 = vmax.f32 %v1324, %v1330
        %s1337 = ssub.s32 %s381, 1
        %v1338 = vstv %s1337
        %v1339 = vadd.s32 %v378, %v1338
        %v1340 = vadd.s32 %v379, %v1338
        %v1341 = vadd.s32 %v380, %v1338
        %vm1342 = vcmp.ge.s32.totalorder %v1339, 0
        %vm1343 = vcmp.ge.s32.totalorder %v1340, 0
        %vm1344 = vcmp.ge.s32.totalorder %v1341, 0
        %vm1345 = vcmp.lt.s32.totalorder %v1339, 768
        %vm1346 = vcmp.lt.s32.totalorder %v1340, 768
        %vm1347 = vcmp.lt.s32.totalorder %v1341, 768
        %vm1348 = vmand %vm1342, %vm1345
        %vm1349 = vmand %vm1343, %vm1346
        %vm1350 = vmand %vm1344, %vm1347
        %v1351 = vsel %vm1348, 1, 0
        %v1352 = vsel %vm1349, 1, 0
        %v1353 = vsel %vm1350, 1, 0
        %vm1354 = vcmp.eq.s32.totalorder %v1351, 1
        %vm1355 = vcmp.eq.s32.totalorder %v1352, 1
        %vm1356 = vcmp.eq.s32.totalorder %v1353, 1
        %v1357 = vsel %vm1354, %v1331, 0.0
        %v1358 = vsel %vm1355, %v1332, 0.0
        %v1359 = vsel %vm1356, %v1333, 0.0
        %v1360 = vsel %vm1354, %v1334, 0.0
        %v1361 = vsel %vm1355, %v1335, 0.0
        %v1362 = vsel %vm1356, %v1336, 0.0
        %v1363 = vld [vmem:[#allocation9 + $0x30] sm:$0x1]
        %v1364 = vpack.c.bf16 %v1360, %v1357
        %v1365 = vpack.c.bf16 %v1361, %v1358
        %v1366 = vpack.c.bf16 %v1362, %v1359
        %v1367 = vpack.c.bf16 %v1363, %v1363
        %1369 = vrot.lane.b32.xlu0 %v1367, 112
        %v1370 = vpop.permute.xlu0 %1369
        %1374 = vrot.lane.b32.xlu0 %v1364, 127
        %v1375 = vpop.permute.xlu0 %1374
        %1376 = vrot.lane.b32.xlu0 %v1365, 127
        %v1377 = vpop.permute.xlu0 %1376
        %1378 = vrot.lane.b32.xlu0 %v1366, 127
        %v1379 = vpop.permute.xlu0 %1378
        %v1380 = vsel %vm663, %v1375, %v1377
        %v1381 = vsel %vm663, %v1377, %v1379
        %v1385 = vsel %vm669, %v1370, 0
        %1387 = vmatprep.subr.bf16.mxu0 %v1381
        %1388 = vmatpush1.bf16.msra.mxu0 %v1380
        %1389 = vmatprep.subr.bf16.mxu0 0
        %1390 = vmatpush1.bf16.msra.mxu0 0
        %1391 = vmatprep.subr.bf16.mxu0 0
        %1392 = vmatpush1.bf16.msra.mxu0 0
        %1393 = vmatprep.subr.bf16.mxu0 0
        %1394 = vmatpush1.bf16.msra.mxu0 0
        %1395 = vmatprep.subr.bf16.mxu0 0
        %1396 = vmatpush1.bf16.msra.mxu0 0
        %1397 = vmatprep.subr.bf16.mxu0 0
        %1398 = vmatpush1.bf16.msra.mxu0 0
        %1399 = vmatprep.subr.bf16.mxu0 0
        %1400 = vmatpush1.bf16.msra.mxu0 0
        %1401 = vmatprep.subr.bf16.mxu0 0
        %1402 = vmatpush1.bf16.msra.mxu0 0
        %1403 = vmatprep.subr.bf16.mxu0 0
        %1404 = vmatpush1.bf16.msra.mxu0 0
        %1405 = vmatprep.subr.bf16.mxu0 0
        %1406 = vmatpush1.bf16.msra.mxu0 0
        %1407 = vmatprep.subr.bf16.mxu0 0
        %1408 = vmatpush1.bf16.msra.mxu0 0
        %1409 = vmatprep.subr.bf16.mxu0 0
        %1410 = vmatpush1.bf16.msra.mxu0 0
        %1411 = vmatprep.subr.bf16.mxu0 0
        %1412 = vmatpush1.bf16.msra.mxu0 0
        %1413 = vmatprep.subr.bf16.mxu0 0
        %1414 = vmatpush1.bf16.msra.mxu0 0
        %1415 = vmatprep.subr.bf16.mxu0 0
        %1416 = vmatpush1.bf16.msra.mxu0 0
        %1417 = vmatprep.subr.bf16.mxu0 0
        %1418 = vmatpush1.bf16.msra.mxu0 0
        %1419 = vmatprep.mubr.bf16.mxu0 0
        %1420 = vmatmul.mubr.bf16.gmra.mrb[0].mxu0 %v1385
        %v1421 = vpop.f32.mrb[0].mxu0
        %v1422 = vadd.f32 0.0, %v1421
        %v1423 = vpop.f32.mrb[0].mxu0
        %v1424 = vadd.f32 0.0, %v1423
        %v1425 = vpop.f32.mrb[0].mxu0
        %v1426 = vpop.f32.mrb[0].mxu0
        %1427 = vdwg.mxu0
        %v1429 = vsel %vm669, %v1367, 0
        %1431 = vmatprep.subr.bf16.mxu0 %v1365
        %1432 = vmatpush1.bf16.msra.mxu0 %v1364
        %1433 = vmatprep.subr.bf16.mxu0 0
        %1434 = vmatpush1.bf16.msra.mxu0 0
        %1435 = vmatprep.subr.bf16.mxu0 0
        %1436 = vmatpush1.bf16.msra.mxu0 0
        %1437 = vmatprep.subr.bf16.mxu0 0
        %1438 = vmatpush1.bf16.msra.mxu0 0
        %1439 = vmatprep.subr.bf16.mxu0 0
        %1440 = vmatpush1.bf16.msra.mxu0 0
        %1441 = vmatprep.subr.bf16.mxu0 0
        %1442 = vmatpush1.bf16.msra.mxu0 0
        %1443 = vmatprep.subr.bf16.mxu0 0
        %1444 = vmatpush1.bf16.msra.mxu0 0
        %1445 = vmatprep.subr.bf16.mxu0 0
        %1446 = vmatpush1.bf16.msra.mxu0 0
        %1447 = vmatprep.subr.bf16.mxu0 0
        %1448 = vmatpush1.bf16.msra.mxu0 0
        %1449 = vmatprep.subr.bf16.mxu0 0
        %1450 = vmatpush1.bf16.msra.mxu0 0
        %1451 = vmatprep.subr.bf16.mxu0 0
        %1452 = vmatpush1.bf16.msra.mxu0 0
        %1453 = vmatprep.subr.bf16.mxu0 0
        %1454 = vmatpush1.bf16.msra.mxu0 0
        %1455 = vmatprep.subr.bf16.mxu0 0
        %1456 = vmatpush1.bf16.msra.mxu0 0
        %1457 = vmatprep.subr.bf16.mxu0 0
        %1458 = vmatpush1.bf16.msra.mxu0 0
        %1459 = vmatprep.subr.bf16.mxu0 0
        %1460 = vmatpush1.bf16.msra.mxu0 0
        %1461 = vmatprep.subr.bf16.mxu0 0
        %1462 = vmatpush1.bf16.msra.mxu0 0
        %1463 = vmatprep.mubr.bf16.mxu0 0
        %1464 = vmatmul.mubr.bf16.gmra.mrb[0].mxu0 %v1429
        %v1465 = vpop.f32.mrb[0].mxu0
        %v1466 = vadd.f32 %v1422, %v1465
        %v1467 = vpop.f32.mrb[0].mxu0
        %v1468 = vadd.f32 %v1424, %v1467
        %v1469 = vpop.f32.mrb[0].mxu0
        %v1470 = vpop.f32.mrb[0].mxu0
        %1471 = vdwg.mxu0
        %1472 = vrot.lane.b32.xlu0 %v1367, 96
        %v1473 = vpop.permute.xlu0 %1472
        %1474 = vrot.lane.b32.xlu0 %v1364, 126
        %v1475 = vpop.permute.xlu0 %1474
        %1476 = vrot.lane.b32.xlu0 %v1365, 126
        %v1477 = vpop.permute.xlu0 %1476
        %1478 = vrot.lane.b32.xlu0 %v1366, 126
        %v1479 = vpop.permute.xlu0 %1478
        %v1480 = vsel %vm852, %v1475, %v1477
        %v1481 = vsel %vm852, %v1477, %v1479
        %v1485 = vsel %vm669, %v1473, 0
        %1487 = vmatprep.subr.bf16.mxu0 %v1481
        %1488 = vmatpush1.bf16.msra.mxu0 %v1480
        %1489 = vmatprep.subr.bf16.mxu0 0
        %1490 = vmatpush1.bf16.msra.mxu0 0
        %1491 = vmatprep.subr.bf16.mxu0 0
        %1492 = vmatpush1.bf16.msra.mxu0 0
        %1493 = vmatprep.subr.bf16.mxu0 0
        %1494 = vmatpush1.bf16.msra.mxu0 0
        %1495 = vmatprep.subr.bf16.mxu0 0
        %1496 = vmatpush1.bf16.msra.mxu0 0
        %1497 = vmatprep.subr.bf16.mxu0 0
        %1498 = vmatpush1.bf16.msra.mxu0 0
        %1499 = vmatprep.subr.bf16.mxu0 0
        %1500 = vmatpush1.bf16.msra.mxu0 0
        %1501 = vmatprep.subr.bf16.mxu0 0
        %1502 = vmatpush1.bf16.msra.mxu0 0
        %1503 = vmatprep.subr.bf16.mxu0 0
        %1504 = vmatpush1.bf16.msra.mxu0 0
        %1505 = vmatprep.subr.bf16.mxu0 0
        %1506 = vmatpush1.bf16.msra.mxu0 0
        %1507 = vmatprep.subr.bf16.mxu0 0
        %1508 = vmatpush1.bf16.msra.mxu0 0
        %1509 = vmatprep.subr.bf16.mxu0 0
        %1510 = vmatpush1.bf16.msra.mxu0 0
        %1511 = vmatprep.subr.bf16.mxu0 0
        %1512 = vmatpush1.bf16.msra.mxu0 0
        %1513 = vmatprep.subr.bf16.mxu0 0
        %1514 = vmatpush1.bf16.msra.mxu0 0
        %1515 = vmatprep.subr.bf16.mxu0 0
        %1516 = vmatpush1.bf16.msra.mxu0 0
        %1517 = vmatprep.subr.bf16.mxu0 0
        %1518 = vmatpush1.bf16.msra.mxu0 0
        %1519 = vmatprep.mubr.bf16.mxu0 0
        %1520 = vmatmul.mubr.bf16.gmra.mrb[0].mxu0 %v1485
        %v1521 = vpop.f32.mrb[0].mxu0
        %v1522 = vadd.f32 0.0, %v1521
        %v1523 = vpop.f32.mrb[0].mxu0
        %v1524 = vadd.f32 0.0, %v1523
        %v1525 = vpop.f32.mrb[0].mxu0
        %v1526 = vpop.f32.mrb[0].mxu0
        %1527 = vdwg.mxu0
        %v1528 = vadd.f32 %v1466, %v1522
        %v1529 = vadd.f32 %v1468, %v1524
        %1531 = vset.pattern.permute.xlu0 48
        %1532 = vperm.xlu0 %1531, %v1363
        %v1533 = vpop.permute.xlu0 %1532
        %v1535 = vadd.f32 %v1528, %v1533
        %v1536 = vadd.f32 %v1529, %v1533
        %v1539 = vcombine.low %v1535, %v1536
        %v1541 = vunpack.c.l.s4 1966171168
        %v1542 = vunpack.c.0.s8 %v1541
        %v1543 = vlaneseq
        %v1544 = vshrl.u32 %v1543, 7
        %v1545 = vsub.s32 %v1542, %v1544
        %v1546 = vrot.slane %v1539, %v1545
        %v1548 = vunpack.c.l.s4 1966171168
        %v1549 = vunpack.c.0.s8 %v1548
        %v1550 = vlaneseq
        %v1551 = vshrl.u32 %v1550, 7
        %v1552 = vsub.s32 %v1549, %v1551
        %v1553 = vrot.slane %v1546, %v1552
        %1555 = vst.msk [vmem:[%s343] sm:$0x3] %vm363, %v1553
        %s1556 = sand.u32 %s168, 1
        %s1557 = scalar_lea.sflag [#allocation5], %s1556
        %s1558 = sand.u32 %s168, 1
        %s1559 = smul.addr %s1558, 2
        %s1560 = scalar_lea.vmem [#allocation11], %s1559
        // Predicated region
        $region61: #{tpu_custom_call.1} parent=35 // pred_check
          %p1561 = pneg %p178
        $region62: #{tpu_custom_call.1} parent=35 // pred_check_branch
          %1563 = sbr.rel (%p1561) target = $region64
        $region63: #{tpu_custom_call.1} parent=35 // pred_region
          %s1564 = smul.u32 2, %s30
          %s1566 = ssub.s32 32, 32
          %1567 = vsyncadd %s1557, %s1566
          %s1568 = smul.addr %s29, 6
          %s1569 = sadd.s32 %s1564, %s1568
          %s1570 = smul.addr %s1569, 16
          %s1571 = scalar_lea.hbm %s4, %s1570
          %s1573 = sshll.u32 %s1560, 4
          %s1574 = int_to_ptr.vmem [resolvable:$true] %s1573
          %1576 = dma.vmem_to_hbm [thread:$0]  %s1574, 32, %s1571, %s1557
        $region64: #{tpu_custom_call.1} parent=35 // pred_fallthru
          _
      $region36: #{tpu_custom_call.1} parent=5 // pred_fallthru
        _
      %p1577 = scmp.le.s32.totalorder 2, %s20
      // Predicated region
      $region65: #{tpu_custom_call.1} parent=5 // pred_check
        %p1578 = pneg %p1577
      $region66: #{tpu_custom_call.1} parent=5 // pred_check_branch
        %1580 = sbr.rel (%p1578) target = $region68
      $region67: #{tpu_custom_call.1} parent=5 // pred_region
        %s1581 = ssub.s32 %s20, 2
        // Predicated region
        $region69: #{tpu_custom_call.1} parent=67 // pred_check
          %p1582 = pneg %p184
        $region70: #{tpu_custom_call.1} parent=67 // pred_check_branch
          %1584 = sbr.rel (%p1582) target = $region72
        $region71: #{tpu_custom_call.1} parent=67 // pred_region
          %s1585 = sand.u32 %s169, 1
          %s1586 = scalar_lea.sflag [#allocation5], %s1585
          %s1587 = sand.u32 %s169, 1
          %s1588 = smul.addr %s1587, 2
          %s1589 = scalar_lea.vmem [#allocation11], %s1588
          %1590 = dma.done %s1586, 32
        $region72: #{tpu_custom_call.1} parent=67 // pred_fallthru
          _
      $region68: #{tpu_custom_call.1} parent=5 // pred_fallthru
        _
    $region6: #{tpu_custom_call.1} parent=1 // loop_footer
      %s24 = sadd.s32 1, %s20
    $region7: #{tpu_custom_call.1} parent=1 // loop_footer_branch
      %19 = sbr.rel target = $region3
    $region8: #{tpu_custom_call.1} parent=1 // loop_exit
      _
    %1591 = vsyncpa [#allocation4], 1
    %s1592 = scalar_lea.sflag [#allocation4], 1
    %1593 = vsyncpa %s1592, 1
    %1594 = vsyncpa [#allocation7], 1
    %s1595 = scalar_lea.sflag [#allocation7], 1
    %1596 = vsyncpa %s1595, 1
    %1597 = vsyncpa [#allocation10], 1
    %1598 = vsyncpa [#allocation5], 1
    %s1599 = scalar_lea.sflag [#allocation5], 1
    %1600 = vsyncpa %s1599, 1

</llo_original>
